<compile_context>
chip_gen: v7x
topology: tpu7x:2x2x1
jax: 0.10.0
libtpu: 0.0.40
codegen_flags: <defaults>
</compile_context>

<pallas_src>
import jax
import jax.numpy as jnp
from jax import lax
from jax.experimental import pallas as pl
from jax.experimental.pallas import tpu as pltpu

EPS = 1e-5  # PyTorch nn.LayerNorm default


# --------------------------------- kernel ------------------------------------

def decoder31_kernel(w_ref, gb_ref, th_ref, x_ref, o_ref):
    # w_ref : (7, 2F, 2F)  block-real weights (f32 or bf16)
    #         w_ref[l] = [[Wr^T, Wi^T], [-Wi^T, Wr^T]] for linear l
    # gb_ref: (24, F) f32  layernorm params; rows [4s..4s+3] = (g_r, b_r, g_i, b_i)
    # th_ref: (6,) f32 in SMEM  soft-threshold thetas
    # x_ref : (tb, 2F) f32  packed [real | imag]
    # o_ref : (tb, 2F) f32  packed [real | imag]
    mm_dtype = w_ref.dtype
    F = gb_ref.shape[1]
    gb = gb_ref[...]                       # load the small (24, F) table once

    def cvlinear(r, i, lidx):
        # one MXU pass: [r | i] @ [[Wr^T, Wi^T], [-Wi^T, Wr^T]] = [real | imag]
        x2 = jnp.concatenate([r, i], axis=-1).astype(mm_dtype)
        y = jnp.dot(x2, w_ref[lidx], preferred_element_type=jnp.float32)
        return y[:, :F], y[:, F:]

    def layernorm(x, g, beta):
        mu = jnp.mean(x, axis=-1, keepdims=True)
        xc = x - mu
        var = jnp.mean(xc * xc, axis=-1, keepdims=True)
        return xc * lax.rsqrt(var + EPS) * g + beta

    def cvlayernorm(r, i, stage):
        base = 4 * stage
        return (layernorm(r, gb[base + 0], gb[base + 1]),
                layernorm(i, gb[base + 2], gb[base + 3]))

    def soft_threshold(r, i, theta):
        # |x|, relu(|x|-theta) and x/|x| fused into one rsqrt-based scale:
        #   scale = max(1 - theta / |x|, 0)
        # Deliberate divergence from the PyTorch path: at |x| == 0 this returns
        # 0 instead of NaN (0/0), thanks to the 1e-12 epsilon under the rsqrt.
        mag2 = r * r + i * i
        inv = lax.rsqrt(mag2 + 1e-12)
        scale = jnp.maximum(1.0 - theta * inv, 0.0)
        return r * scale, i * scale

    x = x_ref[...]
    r, i = x[:, :F], x[:, F:]

    for blk in range(3):                                   # 3x CVResblock (unrolled)
        res_r, res_i = r, i                                # identity branch (f32)
        # resblock body: CVLinear -> CVLayerNorm -> CVSoftThreshold
        r, i = cvlinear(r, i, 2 * blk + 0)
        r, i = cvlayernorm(r, i, 2 * blk + 0)
        r, i = soft_threshold(r, i, th_ref[2 * blk + 0])
        #                 -> CVLinear -> CVLayerNorm
        r, i = cvlinear(r, i, 2 * blk + 1)
        r, i = cvlayernorm(r, i, 2 * blk + 1)
        # residual add + outer CVSoftThreshold
        r, i = r + res_r, i + res_i
        r, i = soft_threshold(r, i, th_ref[2 * blk + 1])

    # final CVLinear of Decoder31
    r, i = cvlinear(r, i, 6)

    o_ref[...] = jnp.concatenate([r, i], axis=-1)


# ------------------------------ param packing ---------------------------------

def pack_params(params, matmul_dtype=jnp.float32):
    """Pack torch-style params into the three stacked kernel operands."""
    blocks = []
    for wr, wi in params["linears"]:          # torch nn.Linear: [out, in], y = x @ W^T
        # Cast Wr / Wi individually (negation is exact in bf16), then build the
        # block-real matrix [[Wr^T, Wi^T], [-Wi^T, Wr^T]].
        wr_t = wr.T.astype(matmul_dtype)
        wi_t = wi.T.astype(matmul_dtype)
        top = jnp.concatenate([wr_t, wi_t], axis=1)
        bot = jnp.concatenate([-wi_t, wr_t], axis=1)
        blocks.append(jnp.concatenate([top, bot], axis=0))                    # (2F,2F)
    w_stack = jnp.stack(blocks)                                               # (7,2F,2F)
    gb_stack = jnp.stack(
        [v for ln in params["layernorms"] for v in ln]).astype(jnp.float32)   # (24, F)
    thetas = jnp.asarray(params["thetas"], jnp.float32).reshape(6)            # (6,)
    return w_stack, gb_stack, thetas


def _pick_tile_b(B):
    # v5e / v6e have ONE TensorCore: extra grid steps are a serial loop costing
    # ~0.35us each, so prefer a single big tile.  Only split when each shard
    # still has >= 256 rows of MXU work -- the same regime where v7x's second
    # core (grid axis marked "parallel") gives a real speedup.
    if B <= 512:
        return B
    for tb in range(min(B, 1024) - (min(B, 1024) % 8), 255, -8):
        if B % tb == 0:
            return tb
    return B                                   # odd large batch: one full block


def _vmem_limit_bytes(w_bytes, gb_bytes, tb, F):
    # Weights / gamma-beta are grid-invariant but still double-buffered by the
    # auto-pipeline; x / out tiles double-buffered; the unrolled 3-resblock body
    # keeps ~14 live (tb, F) f32 intermediates (r, i, res_r, res_i, concat, y,
    # layernorm temporaries, casts).
    est = (2 * (w_bytes + gb_bytes)
           + 2 * 2 * (tb * 2 * F * 4)
           + 14 * tb * F * 4)
    if est <= 12 * 1024 * 1024:                # comfortably under v5e's 16 MiB default
        return None
    try:
        cap = pltpu.get_tpu_info().vmem_capacity_bytes - 4 * 1024 * 1024
    except Exception:
        cap = 60 * 1024 * 1024                 # conservative: v7x physical is 64 MiB
    return min(int(est * 5 // 4), cap)
    # TODO(synk): for F large enough that 2*28*F*F*itemsize nears the chip VMEM
    # budget, single-buffer the grid-invariant weight operand (pl.Buffered(1) /
    # pl.ANY + one-time copy) and add a K-tiling grid axis over F with an f32
    # accumulator + pl.when init/finalize instead of holding whole 2Fx2F weights.


# -------------------------------- wrapper -------------------------------------

def decoder31_forward(x_complex, params, *, tile_b=None, matmul_dtype=jnp.float32):
    xr = jnp.real(x_complex).astype(jnp.float32)
    xi = jnp.imag(x_complex).astype(jnp.float32)
    B, F = xr.shape
    x_packed = jnp.concatenate([xr, xi], axis=-1)          # (B, 2F) = [real | imag]

    w_stack, gb_stack, thetas = pack_params(params, matmul_dtype)

    tb = _pick_tile_b(B) if tile_b is None else tile_b
    assert B % tb == 0

    x_spec = pl.BlockSpec((tb, 2 * F), lambda b: (b, 0))
    w_spec = pl.BlockSpec((7, 2 * F, 2 * F), lambda b: (0, 0, 0))
    gb_spec = pl.BlockSpec((24, F), lambda b: (0, 0))
    th_spec = pl.BlockSpec(memory_space=pltpu.MemorySpace.SMEM)   # scalars -> SMEM
    out_spec = pl.BlockSpec((tb, 2 * F), lambda b: (b, 0))

    itemsize = jnp.dtype(matmul_dtype).itemsize
    vmem_limit = _vmem_limit_bytes(w_stack.size * itemsize, gb_stack.size * 4, tb, F)

    cost = pl.CostEstimate(
        flops=int(2 * B * 7 * (2 * F) ** 2),
        transcendentals=int(B * (12 + 6 * F)),        # 12 rsqrt/ln rows + 6 thresholds
        bytes_accessed=int(w_stack.size * itemsize + gb_stack.size * 4
                           + 2 * B * 2 * F * 4),
    )

    out = pl.pallas_call(
        decoder31_kernel,
        out_shape=jax.ShapeDtypeStruct((B, 2 * F), jnp.float32),
        grid_spec=pltpu.PrefetchScalarGridSpec(
            num_scalar_prefetch=0,
            grid=(B // tb,),
            in_specs=[w_spec, gb_spec, th_spec, x_spec],
            out_specs=out_spec),
        compiler_params=pltpu.CompilerParams(
            dimension_semantics=("parallel",),
            vmem_limit_bytes=vmem_limit),
        cost_estimate=cost,
    )(w_stack, gb_stack, thetas, x_packed)

    return (out[:, :F] + 1j * out[:, F:]).astype(jnp.complex64)


# ---------------------------- parameter init ----------------------------------

def init_params(key, F):
    n_keys = 7 * 2 + 6 * 4 + 1
    keys = iter(jax.random.split(key, n_keys))
    bound = 1.0 / (F ** 0.5)                       # nn.Linear default init range

    def w():
        return jax.random.uniform(next(keys), (F, F), jnp.float32, -bound, bound)

    # 7 CVLinears: 2 per resblock x 3 + final
    linears = [(w(), w()) for _ in range(7)]

    # 6 CVLayerNorms (2 per resblock); PyTorch default is gamma=1, beta=0 — add a
    # small perturbation so the affine plumbing is actually exercised by the test.
    layernorms = []
    for _ in range(6):
        g_r = 1.0 + 0.1 * jax.random.normal(next(keys), (F,), jnp.float32)
        b_r = 0.1 * jax.random.normal(next(keys), (F,), jnp.float32)
        g_i = 1.0 + 0.1 * jax.random.normal(next(keys), (F,), jnp.float32)
        b_i = 0.1 * jax.random.normal(next(keys), (F,), jnp.float32)
        layernorms.append((g_r, b_r, g_i, b_i))

    # 6 CVSoftThresholds (inner + outer per resblock); PyTorch init is zeros — use
    # small positive values so the threshold nonlinearity is exercised.
    thetas = jax.random.uniform(next(keys), (6,), jnp.float32, 0.0, 0.1)

    return {"linears": linears, "layernorms": layernorms, "thetas": thetas}


# ----------------------------- pure-JAX reference ------------------------------

def decoder31_reference(x_complex, params):
    """Op-for-op mirror of the PyTorch Decoder31 forward (4-matmul complex linear,
    per-component layernorm, sqrt/div soft-threshold)."""
    xr = jnp.real(x_complex).astype(jnp.float32)
    xi = jnp.imag(x_complex).astype(jnp.float32)

    def cvlinear(r, i, wr, wi):
        ac = r @ wr.T
        bd = i @ wi.T
        ad = r @ wi.T
        bc = i @ wr.T
        return ac - bd, ad + bc

    def layernorm(x, g, b):
        mu = jnp.mean(x, axis=-1, keepdims=True)
        var = jnp.mean((x - mu) ** 2, axis=-1, keepdims=True)
        return (x - mu) / jnp.sqrt(var + EPS) * g + b

    def soft_threshold(r, i, theta):
        absx = jnp.sqrt(r * r + i * i)
        bmag = jnp.maximum(absx - theta, 0.0)
        return (r / absx) * bmag, (i / absx) * bmag

    lins = params["linears"]
    lns = params["layernorms"]
    ths = params["thetas"]

    r, i = xr, xi
    for blk in range(3):
        res_r, res_i = r, i
        wr, wi = lins[2 * blk]
        r, i = cvlinear(r, i, wr, wi)
        g_r, b_r, g_i, b_i = lns[2 * blk]
        r, i = layernorm(r, g_r, b_r), layernorm(i, g_i, b_i)
        r, i = soft_threshold(r, i, ths[2 * blk])
        wr, wi = lins[2 * blk + 1]
        r, i = cvlinear(r, i, wr, wi)
        g_r, b_r, g_i, b_i = lns[2 * blk + 1]
        r, i = layernorm(r, g_r, b_r), layernorm(i, g_i, b_i)
        r, i = r + res_r, i + res_i
        r, i = soft_threshold(r, i, ths[2 * blk + 1])
    wr, wi = lins[6]
    r, i = cvlinear(r, i, wr, wi)
    return (r + 1j * i).astype(jnp.complex64)


# ---------------------------------- main ---------------------------------------

if __name__ == "__main__":
    B, F = 16, 32    # CVResblock default in_features=32
    key = jax.random.PRNGKey(0)
    k_x, k_p = jax.random.split(key)
    kr, ki = jax.random.split(k_x)

    x = (jax.random.normal(kr, (B, F), jnp.float32)
         + 1j * jax.random.normal(ki, (B, F), jnp.float32)).astype(jnp.complex64)

    params = init_params(k_p, F)
    ref = decoder31_reference(x, params)

    # f32 matmul path: tight numerical check against the op-for-op reference.
    out_f32 = jax.block_until_ready(
        decoder31_forward(x, params, matmul_dtype=jnp.float32))
    assert out_f32.shape == (B, F) and out_f32.dtype == jnp.complex64
    assert jnp.allclose(jnp.real(out_f32), jnp.real(ref), atol=1e-3, rtol=1e-3)
    assert jnp.allclose(jnp.imag(out_f32), jnp.imag(ref), atol=1e-3, rtol=1e-3)

    # bf16 matmul path (f32 accumulation): fast path, loose check — 7 chained
    # complex linears of bf16 drift relative to the pure-f32 reference.
    out_bf16 = jax.block_until_ready(
        decoder31_forward(x, params, matmul_dtype=jnp.bfloat16))
    assert out_bf16.shape == (B, F) and out_bf16.dtype == jnp.complex64
    assert bool(jnp.all(jnp.isfinite(jnp.real(out_bf16))))
    assert bool(jnp.all(jnp.isfinite(jnp.imag(out_bf16))))
    assert jnp.allclose(jnp.real(out_bf16), jnp.real(ref), atol=1e-1, rtol=1e-1)
    assert jnp.allclose(jnp.imag(out_bf16), jnp.imag(ref), atol=1e-1, rtol=1e-1)

    print("KERNEL_OK")
</pallas_src>

<mosaic_0001>
module attributes {stable_mosaic.version = 11 : i64} {
  func.func @decoder31_kernel(%arg0: i32, %arg1: memref<7x64x64xf32, #tpu.memory_space<vmem>>, %arg2: memref<24x32xf32, #tpu.memory_space<vmem>>, %arg3: memref<6xf32, #tpu.memory_space<smem>>, %arg4: memref<16x64xf32, #tpu.memory_space<vmem>>, %arg5: memref<16x64xf32, #tpu.memory_space<vmem>>) attributes {dimension_semantics = [#tpu.dimension_semantics<parallel>], iteration_bounds = array<i64: 1>, scalar_prefetch = 0 : i64, scratch_operands = 0 : i64, tpu.core_type = #tpu.core_type<tc>, window_params = [{pipeline_mode = #tpu.pipeline_mode<synchronous>, transform_indices = @transform_0, window_bounds = array<i64: 7, 64, 64>}, {pipeline_mode = #tpu.pipeline_mode<synchronous>, transform_indices = @transform_1, window_bounds = array<i64: 24, 32>}, {transform_indices = @transform_2, window_bounds = array<i64: 6>}, {transform_indices = @transform_3, window_bounds = array<i64: 16, 64>}, {transform_indices = @transform_4, window_bounds = array<i64: 16, 64>}]} {
    %c0 = arith.constant 0 : index
    %c0_0 = arith.constant 0 : index
    %0 = vector.load %arg2[%c0, %c0_0] : memref<24x32xf32, #tpu.memory_space<vmem>>, vector<24x32xf32>
    %c0_1 = arith.constant 0 : index
    %c0_2 = arith.constant 0 : index
    %1 = vector.load %arg4[%c0_1, %c0_2] : memref<16x64xf32, #tpu.memory_space<vmem>>, vector<16x64xf32>
    %2 = vector.extract_strided_slice %1 {offsets = [0, 0], sizes = [16, 32], strides = [1, 1]} : vector<16x64xf32> to vector<16x32xf32>
    %3 = vector.extract_strided_slice %1 {offsets = [0, 32], sizes = [16, 32], strides = [1, 1]} : vector<16x64xf32> to vector<16x32xf32>
    %4 = tpu.concatenate %2, %3 in 1 : vector<16x32xf32>, vector<16x32xf32> -> vector<16x64xf32>
    %c0_3 = arith.constant 0 : index
    %c0_4 = arith.constant 0 : index
    %c0_5 = arith.constant 0 : index
    %5 = vector.load %arg1[%c0_3, %c0_4, %c0_5] : memref<7x64x64xf32, #tpu.memory_space<vmem>>, vector<1x64x64xf32>
    %6 = vector.shape_cast %5 : vector<1x64x64xf32> to vector<64x64xf32>
    %cst = arith.constant dense<0.000000e+00> : vector<16x64xf32>
    %7 = tpu.matmul %4, %6, %cst {dimension_numbers = #tpu.dot_dimension_numbers<[1], [0], [0], [1], [0, 0, 1, 1], [], []>} : vector<16x64xf32>, vector<64x64xf32>, vector<16x64xf32> -> vector<16x64xf32>
    %8 = vector.extract_strided_slice %7 {offsets = [0, 0], sizes = [16, 32], strides = [1, 1]} : vector<16x64xf32> to vector<16x32xf32>
    %9 = vector.extract_strided_slice %7 {offsets = [0, 32], sizes = [16, 32], strides = [1, 1]} : vector<16x64xf32> to vector<16x32xf32>
    %10 = vector.extract_strided_slice %0 {offsets = [0, 0], sizes = [1, 32], strides = [1, 1]} : vector<24x32xf32> to vector<1x32xf32>
    %11 = vector.shape_cast %10 : vector<1x32xf32> to vector<32xf32>
    %12 = vector.extract_strided_slice %0 {offsets = [1, 0], sizes = [1, 32], strides = [1, 1]} : vector<24x32xf32> to vector<1x32xf32>
    %13 = vector.shape_cast %12 : vector<1x32xf32> to vector<32xf32>
    %cst_6 = arith.constant dense<0.000000e+00> : vector<16xf32>
    %14 = vector.multi_reduction <add>, %8, %cst_6 [1] : vector<16x32xf32> to vector<16xf32>
    %15 = vector.shape_cast %14 : vector<16xf32> to vector<16x1xf32>
    %cst_7 = arith.constant 3.200000e+01 : f32
    %16 = vector.broadcast %cst_7 : f32 to vector<16x1xf32>
    %17 = arith.divf %15, %16 : vector<16x1xf32>
    %18 = vector.broadcast %17 : vector<16x1xf32> to vector<16x32xf32>
    %19 = arith.subf %8, %18 : vector<16x32xf32>
    %20 = arith.mulf %19, %19 : vector<16x32xf32>
    %cst_8 = arith.constant dense<0.000000e+00> : vector<16xf32>
    %21 = vector.multi_reduction <add>, %20, %cst_8 [1] : vector<16x32xf32> to vector<16xf32>
    %22 = vector.shape_cast %21 : vector<16xf32> to vector<16x1xf32>
    %cst_9 = arith.constant 3.200000e+01 : f32
    %23 = vector.broadcast %cst_9 : f32 to vector<16x1xf32>
    %24 = arith.divf %22, %23 : vector<16x1xf32>
    %cst_10 = arith.constant 9.99999974E-6 : f32
    %25 = vector.broadcast %cst_10 : f32 to vector<16x1xf32>
    %26 = arith.addf %24, %25 : vector<16x1xf32>
    %27 = math.rsqrt %26 : vector<16x1xf32>
    %28 = vector.broadcast %27 : vector<16x1xf32> to vector<16x32xf32>
    %29 = arith.mulf %19, %28 : vector<16x32xf32>
    %30 = vector.shape_cast %11 : vector<32xf32> to vector<1x32xf32>
    %31 = vector.broadcast %30 : vector<1x32xf32> to vector<16x32xf32>
    %32 = arith.mulf %29, %31 : vector<16x32xf32>
    %33 = vector.shape_cast %13 : vector<32xf32> to vector<1x32xf32>
    %34 = vector.broadcast %33 : vector<1x32xf32> to vector<16x32xf32>
    %35 = arith.addf %32, %34 : vector<16x32xf32>
    %36 = vector.extract_strided_slice %0 {offsets = [2, 0], sizes = [1, 32], strides = [1, 1]} : vector<24x32xf32> to vector<1x32xf32>
    %37 = vector.shape_cast %36 : vector<1x32xf32> to vector<32xf32>
    %38 = vector.extract_strided_slice %0 {offsets = [3, 0], sizes = [1, 32], strides = [1, 1]} : vector<24x32xf32> to vector<1x32xf32>
    %39 = vector.shape_cast %38 : vector<1x32xf32> to vector<32xf32>
    %cst_11 = arith.constant dense<0.000000e+00> : vector<16xf32>
    %40 = vector.multi_reduction <add>, %9, %cst_11 [1] : vector<16x32xf32> to vector<16xf32>
    %41 = vector.shape_cast %40 : vector<16xf32> to vector<16x1xf32>
    %cst_12 = arith.constant 3.200000e+01 : f32
    %42 = vector.broadcast %cst_12 : f32 to vector<16x1xf32>
    %43 = arith.divf %41, %42 : vector<16x1xf32>
    %44 = vector.broadcast %43 : vector<16x1xf32> to vector<16x32xf32>
    %45 = arith.subf %9, %44 : vector<16x32xf32>
    %46 = arith.mulf %45, %45 : vector<16x32xf32>
    %cst_13 = arith.constant dense<0.000000e+00> : vector<16xf32>
    %47 = vector.multi_reduction <add>, %46, %cst_13 [1] : vector<16x32xf32> to vector<16xf32>
    %48 = vector.shape_cast %47 : vector<16xf32> to vector<16x1xf32>
    %cst_14 = arith.constant 3.200000e+01 : f32
    %49 = vector.broadcast %cst_14 : f32 to vector<16x1xf32>
    %50 = arith.divf %48, %49 : vector<16x1xf32>
    %cst_15 = arith.constant 9.99999974E-6 : f32
    %51 = vector.broadcast %cst_15 : f32 to vector<16x1xf32>
    %52 = arith.addf %50, %51 : vector<16x1xf32>
    %53 = math.rsqrt %52 : vector<16x1xf32>
    %54 = vector.broadcast %53 : vector<16x1xf32> to vector<16x32xf32>
    %55 = arith.mulf %45, %54 : vector<16x32xf32>
    %56 = vector.shape_cast %37 : vector<32xf32> to vector<1x32xf32>
    %57 = vector.broadcast %56 : vector<1x32xf32> to vector<16x32xf32>
    %58 = arith.mulf %55, %57 : vector<16x32xf32>
    %59 = vector.shape_cast %39 : vector<32xf32> to vector<1x32xf32>
    %60 = vector.broadcast %59 : vector<1x32xf32> to vector<16x32xf32>
    %61 = arith.addf %58, %60 : vector<16x32xf32>
    %c0_16 = arith.constant 0 : index
    %62 = memref.load %arg3[%c0_16] : memref<6xf32, #tpu.memory_space<smem>>
    %63 = arith.mulf %35, %35 : vector<16x32xf32>
    %64 = arith.mulf %61, %61 : vector<16x32xf32>
    %65 = arith.addf %63, %64 : vector<16x32xf32>
    %cst_17 = arith.constant 9.99999996E-13 : f32
    %66 = vector.broadcast %cst_17 : f32 to vector<16x32xf32>
    %67 = arith.addf %65, %66 : vector<16x32xf32>
    %68 = math.rsqrt %67 : vector<16x32xf32>
    %69 = vector.broadcast %62 : f32 to vector<16x32xf32>
    %70 = arith.mulf %69, %68 : vector<16x32xf32>
    %cst_18 = arith.constant 1.000000e+00 : f32
    %71 = vector.broadcast %cst_18 : f32 to vector<16x32xf32>
    %72 = arith.subf %71, %70 : vector<16x32xf32>
    %cst_19 = arith.constant 0.000000e+00 : f32
    %73 = vector.broadcast %cst_19 : f32 to vector<16x32xf32>
    %74 = arith.maximumf %72, %73 : vector<16x32xf32>
    %75 = arith.mulf %35, %74 : vector<16x32xf32>
    %76 = arith.mulf %61, %74 : vector<16x32xf32>
    %77 = tpu.concatenate %75, %76 in 1 : vector<16x32xf32>, vector<16x32xf32> -> vector<16x64xf32>
    %c1 = arith.constant 1 : index
    %c0_20 = arith.constant 0 : index
    %c0_21 = arith.constant 0 : index
    %78 = vector.load %arg1[%c1, %c0_20, %c0_21] : memref<7x64x64xf32, #tpu.memory_space<vmem>>, vector<1x64x64xf32>
    %79 = vector.shape_cast %78 : vector<1x64x64xf32> to vector<64x64xf32>
    %cst_22 = arith.constant dense<0.000000e+00> : vector<16x64xf32>
    %80 = tpu.matmul %77, %79, %cst_22 {dimension_numbers = #tpu.dot_dimension_numbers<[1], [0], [0], [1], [0, 0, 1, 1], [], []>} : vector<16x64xf32>, vector<64x64xf32>, vector<16x64xf32> -> vector<16x64xf32>
    %81 = vector.extract_strided_slice %80 {offsets = [0, 0], sizes = [16, 32], strides = [1, 1]} : vector<16x64xf32> to vector<16x32xf32>
    %82 = vector.extract_strided_slice %80 {offsets = [0, 32], sizes = [16, 32], strides = [1, 1]} : vector<16x64xf32> to vector<16x32xf32>
    %83 = vector.extract_strided_slice %0 {offsets = [4, 0], sizes = [1, 32], strides = [1, 1]} : vector<24x32xf32> to vector<1x32xf32>
    %84 = vector.shape_cast %83 : vector<1x32xf32> to vector<32xf32>
    %85 = vector.extract_strided_slice %0 {offsets = [5, 0], sizes = [1, 32], strides = [1, 1]} : vector<24x32xf32> to vector<1x32xf32>
    %86 = vector.shape_cast %85 : vector<1x32xf32> to vector<32xf32>
    %cst_23 = arith.constant dense<0.000000e+00> : vector<16xf32>
    %87 = vector.multi_reduction <add>, %81, %cst_23 [1] : vector<16x32xf32> to vector<16xf32>
    %88 = vector.shape_cast %87 : vector<16xf32> to vector<16x1xf32>
    %cst_24 = arith.constant 3.200000e+01 : f32
    %89 = vector.broadcast %cst_24 : f32 to vector<16x1xf32>
    %90 = arith.divf %88, %89 : vector<16x1xf32>
    %91 = vector.broadcast %90 : vector<16x1xf32> to vector<16x32xf32>
    %92 = arith.subf %81, %91 : vector<16x32xf32>
    %93 = arith.mulf %92, %92 : vector<16x32xf32>
    %cst_25 = arith.constant dense<0.000000e+00> : vector<16xf32>
    %94 = vector.multi_reduction <add>, %93, %cst_25 [1] : vector<16x32xf32> to vector<16xf32>
    %95 = vector.shape_cast %94 : vector<16xf32> to vector<16x1xf32>
    %cst_26 = arith.constant 3.200000e+01 : f32
    %96 = vector.broadcast %cst_26 : f32 to vector<16x1xf32>
    %97 = arith.divf %95, %96 : vector<16x1xf32>
    %cst_27 = arith.constant 9.99999974E-6 : f32
    %98 = vector.broadcast %cst_27 : f32 to vector<16x1xf32>
    %99 = arith.addf %97, %98 : vector<16x1xf32>
    %100 = math.rsqrt %99 : vector<16x1xf32>
    %101 = vector.broadcast %100 : vector<16x1xf32> to vector<16x32xf32>
    %102 = arith.mulf %92, %101 : vector<16x32xf32>
    %103 = vector.shape_cast %84 : vector<32xf32> to vector<1x32xf32>
    %104 = vector.broadcast %103 : vector<1x32xf32> to vector<16x32xf32>
    %105 = arith.mulf %102, %104 : vector<16x32xf32>
    %106 = vector.shape_cast %86 : vector<32xf32> to vector<1x32xf32>
    %107 = vector.broadcast %106 : vector<1x32xf32> to vector<16x32xf32>
    %108 = arith.addf %105, %107 : vector<16x32xf32>
    %109 = vector.extract_strided_slice %0 {offsets = [6, 0], sizes = [1, 32], strides = [1, 1]} : vector<24x32xf32> to vector<1x32xf32>
    %110 = vector.shape_cast %109 : vector<1x32xf32> to vector<32xf32>
    %111 = vector.extract_strided_slice %0 {offsets = [7, 0], sizes = [1, 32], strides = [1, 1]} : vector<24x32xf32> to vector<1x32xf32>
    %112 = vector.shape_cast %111 : vector<1x32xf32> to vector<32xf32>
    %cst_28 = arith.constant dense<0.000000e+00> : vector<16xf32>
    %113 = vector.multi_reduction <add>, %82, %cst_28 [1] : vector<16x32xf32> to vector<16xf32>
    %114 = vector.shape_cast %113 : vector<16xf32> to vector<16x1xf32>
    %cst_29 = arith.constant 3.200000e+01 : f32
    %115 = vector.broadcast %cst_29 : f32 to vector<16x1xf32>
    %116 = arith.divf %114, %115 : vector<16x1xf32>
    %117 = vector.broadcast %116 : vector<16x1xf32> to vector<16x32xf32>
    %118 = arith.subf %82, %117 : vector<16x32xf32>
    %119 = arith.mulf %118, %118 : vector<16x32xf32>
    %cst_30 = arith.constant dense<0.000000e+00> : vector<16xf32>
    %120 = vector.multi_reduction <add>, %119, %cst_30 [1] : vector<16x32xf32> to vector<16xf32>
    %121 = vector.shape_cast %120 : vector<16xf32> to vector<16x1xf32>
    %cst_31 = arith.constant 3.200000e+01 : f32
    %122 = vector.broadcast %cst_31 : f32 to vector<16x1xf32>
    %123 = arith.divf %121, %122 : vector<16x1xf32>
    %cst_32 = arith.constant 9.99999974E-6 : f32
    %124 = vector.broadcast %cst_32 : f32 to vector<16x1xf32>
    %125 = arith.addf %123, %124 : vector<16x1xf32>
    %126 = math.rsqrt %125 : vector<16x1xf32>
    %127 = vector.broadcast %126 : vector<16x1xf32> to vector<16x32xf32>
    %128 = arith.mulf %118, %127 : vector<16x32xf32>
    %129 = vector.shape_cast %110 : vector<32xf32> to vector<1x32xf32>
    %130 = vector.broadcast %129 : vector<1x32xf32> to vector<16x32xf32>
    %131 = arith.mulf %128, %130 : vector<16x32xf32>
    %132 = vector.shape_cast %112 : vector<32xf32> to vector<1x32xf32>
    %133 = vector.broadcast %132 : vector<1x32xf32> to vector<16x32xf32>
    %134 = arith.addf %131, %133 : vector<16x32xf32>
    %135 = arith.addf %108, %2 : vector<16x32xf32>
    %136 = arith.addf %134, %3 : vector<16x32xf32>
    %c1_33 = arith.constant 1 : index
    %137 = memref.load %arg3[%c1_33] : memref<6xf32, #tpu.memory_space<smem>>
    %138 = arith.mulf %135, %135 : vector<16x32xf32>
    %139 = arith.mulf %136, %136 : vector<16x32xf32>
    %140 = arith.addf %138, %139 : vector<16x32xf32>
    %cst_34 = arith.constant 9.99999996E-13 : f32
    %141 = vector.broadcast %cst_34 : f32 to vector<16x32xf32>
    %142 = arith.addf %140, %141 : vector<16x32xf32>
    %143 = math.rsqrt %142 : vector<16x32xf32>
    %144 = vector.broadcast %137 : f32 to vector<16x32xf32>
    %145 = arith.mulf %144, %143 : vector<16x32xf32>
    %cst_35 = arith.constant 1.000000e+00 : f32
    %146 = vector.broadcast %cst_35 : f32 to vector<16x32xf32>
    %147 = arith.subf %146, %145 : vector<16x32xf32>
    %cst_36 = arith.constant 0.000000e+00 : f32
    %148 = vector.broadcast %cst_36 : f32 to vector<16x32xf32>
    %149 = arith.maximumf %147, %148 : vector<16x32xf32>
    %150 = arith.mulf %135, %149 : vector<16x32xf32>
    %151 = arith.mulf %136, %149 : vector<16x32xf32>
    %152 = tpu.concatenate %150, %151 in 1 : vector<16x32xf32>, vector<16x32xf32> -> vector<16x64xf32>
    %c2 = arith.constant 2 : index
    %c0_37 = arith.constant 0 : index
    %c0_38 = arith.constant 0 : index
    %153 = vector.load %arg1[%c2, %c0_37, %c0_38] : memref<7x64x64xf32, #tpu.memory_space<vmem>>, vector<1x64x64xf32>
    %154 = vector.shape_cast %153 : vector<1x64x64xf32> to vector<64x64xf32>
    %cst_39 = arith.constant dense<0.000000e+00> : vector<16x64xf32>
    %155 = tpu.matmul %152, %154, %cst_39 {dimension_numbers = #tpu.dot_dimension_numbers<[1], [0], [0], [1], [0, 0, 1, 1], [], []>} : vector<16x64xf32>, vector<64x64xf32>, vector<16x64xf32> -> vector<16x64xf32>
    %156 = vector.extract_strided_slice %155 {offsets = [0, 0], sizes = [16, 32], strides = [1, 1]} : vector<16x64xf32> to vector<16x32xf32>
    %157 = vector.extract_strided_slice %155 {offsets = [0, 32], sizes = [16, 32], strides = [1, 1]} : vector<16x64xf32> to vector<16x32xf32>
    %158 = vector.extract_strided_slice %0 {offsets = [8, 0], sizes = [1, 32], strides = [1, 1]} : vector<24x32xf32> to vector<1x32xf32>
    %159 = vector.shape_cast %158 : vector<1x32xf32> to vector<32xf32>
    %160 = vector.extract_strided_slice %0 {offsets = [9, 0], sizes = [1, 32], strides = [1, 1]} : vector<24x32xf32> to vector<1x32xf32>
    %161 = vector.shape_cast %160 : vector<1x32xf32> to vector<32xf32>
    %cst_40 = arith.constant dense<0.000000e+00> : vector<16xf32>
    %162 = vector.multi_reduction <add>, %156, %cst_40 [1] : vector<16x32xf32> to vector<16xf32>
    %163 = vector.shape_cast %162 : vector<16xf32> to vector<16x1xf32>
    %cst_41 = arith.constant 3.200000e+01 : f32
    %164 = vector.broadcast %cst_41 : f32 to vector<16x1xf32>
    %165 = arith.divf %163, %164 : vector<16x1xf32>
    %166 = vector.broadcast %165 : vector<16x1xf32> to vector<16x32xf32>
    %167 = arith.subf %156, %166 : vector<16x32xf32>
    %168 = arith.mulf %167, %167 : vector<16x32xf32>
    %cst_42 = arith.constant dense<0.000000e+00> : vector<16xf32>
    %169 = vector.multi_reduction <add>, %168, %cst_42 [1] : vector<16x32xf32> to vector<16xf32>
    %170 = vector.shape_cast %169 : vector<16xf32> to vector<16x1xf32>
    %cst_43 = arith.constant 3.200000e+01 : f32
    %171 = vector.broadcast %cst_43 : f32 to vector<16x1xf32>
    %172 = arith.divf %170, %171 : vector<16x1xf32>
    %cst_44 = arith.constant 9.99999974E-6 : f32
    %173 = vector.broadcast %cst_44 : f32 to vector<16x1xf32>
    %174 = arith.addf %172, %173 : vector<16x1xf32>
    %175 = math.rsqrt %174 : vector<16x1xf32>
    %176 = vector.broadcast %175 : vector<16x1xf32> to vector<16x32xf32>
    %177 = arith.mulf %167, %176 : vector<16x32xf32>
    %178 = vector.shape_cast %159 : vector<32xf32> to vector<1x32xf32>
    %179 = vector.broadcast %178 : vector<1x32xf32> to vector<16x32xf32>
    %180 = arith.mulf %177, %179 : vector<16x32xf32>
    %181 = vector.shape_cast %161 : vector<32xf32> to vector<1x32xf32>
    %182 = vector.broadcast %181 : vector<1x32xf32> to vector<16x32xf32>
    %183 = arith.addf %180, %182 : vector<16x32xf32>
    %184 = vector.extract_strided_slice %0 {offsets = [10, 0], sizes = [1, 32], strides = [1, 1]} : vector<24x32xf32> to vector<1x32xf32>
    %185 = vector.shape_cast %184 : vector<1x32xf32> to vector<32xf32>
    %186 = vector.extract_strided_slice %0 {offsets = [11, 0], sizes = [1, 32], strides = [1, 1]} : vector<24x32xf32> to vector<1x32xf32>
    %187 = vector.shape_cast %186 : vector<1x32xf32> to vector<32xf32>
    %cst_45 = arith.constant dense<0.000000e+00> : vector<16xf32>
    %188 = vector.multi_reduction <add>, %157, %cst_45 [1] : vector<16x32xf32> to vector<16xf32>
    %189 = vector.shape_cast %188 : vector<16xf32> to vector<16x1xf32>
    %cst_46 = arith.constant 3.200000e+01 : f32
    %190 = vector.broadcast %cst_46 : f32 to vector<16x1xf32>
    %191 = arith.divf %189, %190 : vector<16x1xf32>
    %192 = vector.broadcast %191 : vector<16x1xf32> to vector<16x32xf32>
    %193 = arith.subf %157, %192 : vector<16x32xf32>
    %194 = arith.mulf %193, %193 : vector<16x32xf32>
    %cst_47 = arith.constant dense<0.000000e+00> : vector<16xf32>
    %195 = vector.multi_reduction <add>, %194, %cst_47 [1] : vector<16x32xf32> to vector<16xf32>
    %196 = vector.shape_cast %195 : vector<16xf32> to vector<16x1xf32>
    %cst_48 = arith.constant 3.200000e+01 : f32
    %197 = vector.broadcast %cst_48 : f32 to vector<16x1xf32>
    %198 = arith.divf %196, %197 : vector<16x1xf32>
    %cst_49 = arith.constant 9.99999974E-6 : f32
    %199 = vector.broadcast %cst_49 : f32 to vector<16x1xf32>
    %200 = arith.addf %198, %199 : vector<16x1xf32>
    %201 = math.rsqrt %200 : vector<16x1xf32>
    %202 = vector.broadcast %201 : vector<16x1xf32> to vector<16x32xf32>
    %203 = arith.mulf %193, %202 : vector<16x32xf32>
    %204 = vector.shape_cast %185 : vector<32xf32> to vector<1x32xf32>
    %205 = vector.broadcast %204 : vector<1x32xf32> to vector<16x32xf32>
    %206 = arith.mulf %203, %205 : vector<16x32xf32>
    %207 = vector.shape_cast %187 : vector<32xf32> to vector<1x32xf32>
    %208 = vector.broadcast %207 : vector<1x32xf32> to vector<16x32xf32>
    %209 = arith.addf %206, %208 : vector<16x32xf32>
    %c2_50 = arith.constant 2 : index
    %210 = memref.load %arg3[%c2_50] : memref<6xf32, #tpu.memory_space<smem>>
    %211 = arith.mulf %183, %183 : vector<16x32xf32>
    %212 = arith.mulf %209, %209 : vector<16x32xf32>
    %213 = arith.addf %211, %212 : vector<16x32xf32>
    %cst_51 = arith.constant 9.99999996E-13 : f32
    %214 = vector.broadcast %cst_51 : f32 to vector<16x32xf32>
    %215 = arith.addf %213, %214 : vector<16x32xf32>
    %216 = math.rsqrt %215 : vector<16x32xf32>
    %217 = vector.broadcast %210 : f32 to vector<16x32xf32>
    %218 = arith.mulf %217, %216 : vector<16x32xf32>
    %cst_52 = arith.constant 1.000000e+00 : f32
    %219 = vector.broadcast %cst_52 : f32 to vector<16x32xf32>
    %220 = arith.subf %219, %218 : vector<16x32xf32>
    %cst_53 = arith.constant 0.000000e+00 : f32
    %221 = vector.broadcast %cst_53 : f32 to vector<16x32xf32>
    %222 = arith.maximumf %220, %221 : vector<16x32xf32>
    %223 = arith.mulf %183, %222 : vector<16x32xf32>
    %224 = arith.mulf %209, %222 : vector<16x32xf32>
    %225 = tpu.concatenate %223, %224 in 1 : vector<16x32xf32>, vector<16x32xf32> -> vector<16x64xf32>
    %c3 = arith.constant 3 : index
    %c0_54 = arith.constant 0 : index
    %c0_55 = arith.constant 0 : index
    %226 = vector.load %arg1[%c3, %c0_54, %c0_55] : memref<7x64x64xf32, #tpu.memory_space<vmem>>, vector<1x64x64xf32>
    %227 = vector.shape_cast %226 : vector<1x64x64xf32> to vector<64x64xf32>
    %cst_56 = arith.constant dense<0.000000e+00> : vector<16x64xf32>
    %228 = tpu.matmul %225, %227, %cst_56 {dimension_numbers = #tpu.dot_dimension_numbers<[1], [0], [0], [1], [0, 0, 1, 1], [], []>} : vector<16x64xf32>, vector<64x64xf32>, vector<16x64xf32> -> vector<16x64xf32>
    %229 = vector.extract_strided_slice %228 {offsets = [0, 0], sizes = [16, 32], strides = [1, 1]} : vector<16x64xf32> to vector<16x32xf32>
    %230 = vector.extract_strided_slice %228 {offsets = [0, 32], sizes = [16, 32], strides = [1, 1]} : vector<16x64xf32> to vector<16x32xf32>
    %231 = vector.extract_strided_slice %0 {offsets = [12, 0], sizes = [1, 32], strides = [1, 1]} : vector<24x32xf32> to vector<1x32xf32>
    %232 = vector.shape_cast %231 : vector<1x32xf32> to vector<32xf32>
    %233 = vector.extract_strided_slice %0 {offsets = [13, 0], sizes = [1, 32], strides = [1, 1]} : vector<24x32xf32> to vector<1x32xf32>
    %234 = vector.shape_cast %233 : vector<1x32xf32> to vector<32xf32>
    %cst_57 = arith.constant dense<0.000000e+00> : vector<16xf32>
    %235 = vector.multi_reduction <add>, %229, %cst_57 [1] : vector<16x32xf32> to vector<16xf32>
    %236 = vector.shape_cast %235 : vector<16xf32> to vector<16x1xf32>
    %cst_58 = arith.constant 3.200000e+01 : f32
    %237 = vector.broadcast %cst_58 : f32 to vector<16x1xf32>
    %238 = arith.divf %236, %237 : vector<16x1xf32>
    %239 = vector.broadcast %238 : vector<16x1xf32> to vector<16x32xf32>
    %240 = arith.subf %229, %239 : vector<16x32xf32>
    %241 = arith.mulf %240, %240 : vector<16x32xf32>
    %cst_59 = arith.constant dense<0.000000e+00> : vector<16xf32>
    %242 = vector.multi_reduction <add>, %241, %cst_59 [1] : vector<16x32xf32> to vector<16xf32>
    %243 = vector.shape_cast %242 : vector<16xf32> to vector<16x1xf32>
    %cst_60 = arith.constant 3.200000e+01 : f32
    %244 = vector.broadcast %cst_60 : f32 to vector<16x1xf32>
    %245 = arith.divf %243, %244 : vector<16x1xf32>
    %cst_61 = arith.constant 9.99999974E-6 : f32
    %246 = vector.broadcast %cst_61 : f32 to vector<16x1xf32>
    %247 = arith.addf %245, %246 : vector<16x1xf32>
    %248 = math.rsqrt %247 : vector<16x1xf32>
    %249 = vector.broadcast %248 : vector<16x1xf32> to vector<16x32xf32>
    %250 = arith.mulf %240, %249 : vector<16x32xf32>
    %251 = vector.shape_cast %232 : vector<32xf32> to vector<1x32xf32>
    %252 = vector.broadcast %251 : vector<1x32xf32> to vector<16x32xf32>
    %253 = arith.mulf %250, %252 : vector<16x32xf32>
    %254 = vector.shape_cast %234 : vector<32xf32> to vector<1x32xf32>
    %255 = vector.broadcast %254 : vector<1x32xf32> to vector<16x32xf32>
    %256 = arith.addf %253, %255 : vector<16x32xf32>
    %257 = vector.extract_strided_slice %0 {offsets = [14, 0], sizes = [1, 32], strides = [1, 1]} : vector<24x32xf32> to vector<1x32xf32>
    %258 = vector.shape_cast %257 : vector<1x32xf32> to vector<32xf32>
    %259 = vector.extract_strided_slice %0 {offsets = [15, 0], sizes = [1, 32], strides = [1, 1]} : vector<24x32xf32> to vector<1x32xf32>
    %260 = vector.shape_cast %259 : vector<1x32xf32> to vector<32xf32>
    %cst_62 = arith.constant dense<0.000000e+00> : vector<16xf32>
    %261 = vector.multi_reduction <add>, %230, %cst_62 [1] : vector<16x32xf32> to vector<16xf32>
    %262 = vector.shape_cast %261 : vector<16xf32> to vector<16x1xf32>
    %cst_63 = arith.constant 3.200000e+01 : f32
    %263 = vector.broadcast %cst_63 : f32 to vector<16x1xf32>
    %264 = arith.divf %262, %263 : vector<16x1xf32>
    %265 = vector.broadcast %264 : vector<16x1xf32> to vector<16x32xf32>
    %266 = arith.subf %230, %265 : vector<16x32xf32>
    %267 = arith.mulf %266, %266 : vector<16x32xf32>
    %cst_64 = arith.constant dense<0.000000e+00> : vector<16xf32>
    %268 = vector.multi_reduction <add>, %267, %cst_64 [1] : vector<16x32xf32> to vector<16xf32>
    %269 = vector.shape_cast %268 : vector<16xf32> to vector<16x1xf32>
    %cst_65 = arith.constant 3.200000e+01 : f32
    %270 = vector.broadcast %cst_65 : f32 to vector<16x1xf32>
    %271 = arith.divf %269, %270 : vector<16x1xf32>
    %cst_66 = arith.constant 9.99999974E-6 : f32
    %272 = vector.broadcast %cst_66 : f32 to vector<16x1xf32>
    %273 = arith.addf %271, %272 : vector<16x1xf32>
    %274 = math.rsqrt %273 : vector<16x1xf32>
    %275 = vector.broadcast %274 : vector<16x1xf32> to vector<16x32xf32>
    %276 = arith.mulf %266, %275 : vector<16x32xf32>
    %277 = vector.shape_cast %258 : vector<32xf32> to vector<1x32xf32>
    %278 = vector.broadcast %277 : vector<1x32xf32> to vector<16x32xf32>
    %279 = arith.mulf %276, %278 : vector<16x32xf32>
    %280 = vector.shape_cast %260 : vector<32xf32> to vector<1x32xf32>
    %281 = vector.broadcast %280 : vector<1x32xf32> to vector<16x32xf32>
    %282 = arith.addf %279, %281 : vector<16x32xf32>
    %283 = arith.addf %256, %150 : vector<16x32xf32>
    %284 = arith.addf %282, %151 : vector<16x32xf32>
    %c3_67 = arith.constant 3 : index
    %285 = memref.load %arg3[%c3_67] : memref<6xf32, #tpu.memory_space<smem>>
    %286 = arith.mulf %283, %283 : vector<16x32xf32>
    %287 = arith.mulf %284, %284 : vector<16x32xf32>
    %288 = arith.addf %286, %287 : vector<16x32xf32>
    %cst_68 = arith.constant 9.99999996E-13 : f32
    %289 = vector.broadcast %cst_68 : f32 to vector<16x32xf32>
    %290 = arith.addf %288, %289 : vector<16x32xf32>
    %291 = math.rsqrt %290 : vector<16x32xf32>
    %292 = vector.broadcast %285 : f32 to vector<16x32xf32>
    %293 = arith.mulf %292, %291 : vector<16x32xf32>
    %cst_69 = arith.constant 1.000000e+00 : f32
    %294 = vector.broadcast %cst_69 : f32 to vector<16x32xf32>
    %295 = arith.subf %294, %293 : vector<16x32xf32>
    %cst_70 = arith.constant 0.000000e+00 : f32
    %296 = vector.broadcast %cst_70 : f32 to vector<16x32xf32>
    %297 = arith.maximumf %295, %296 : vector<16x32xf32>
    %298 = arith.mulf %283, %297 : vector<16x32xf32>
    %299 = arith.mulf %284, %297 : vector<16x32xf32>
    %300 = tpu.concatenate %298, %299 in 1 : vector<16x32xf32>, vector<16x32xf32> -> vector<16x64xf32>
    %c4 = arith.constant 4 : index
    %c0_71 = arith.constant 0 : index
    %c0_72 = arith.constant 0 : index
    %301 = vector.load %arg1[%c4, %c0_71, %c0_72] : memref<7x64x64xf32, #tpu.memory_space<vmem>>, vector<1x64x64xf32>
    %302 = vector.shape_cast %301 : vector<1x64x64xf32> to vector<64x64xf32>
    %cst_73 = arith.constant dense<0.000000e+00> : vector<16x64xf32>
    %303 = tpu.matmul %300, %302, %cst_73 {dimension_numbers = #tpu.dot_dimension_numbers<[1], [0], [0], [1], [0, 0, 1, 1], [], []>} : vector<16x64xf32>, vector<64x64xf32>, vector<16x64xf32> -> vector<16x64xf32>
    %304 = vector.extract_strided_slice %303 {offsets = [0, 0], sizes = [16, 32], strides = [1, 1]} : vector<16x64xf32> to vector<16x32xf32>
    %305 = vector.extract_strided_slice %303 {offsets = [0, 32], sizes = [16, 32], strides = [1, 1]} : vector<16x64xf32> to vector<16x32xf32>
    %306 = vector.extract_strided_slice %0 {offsets = [16, 0], sizes = [1, 32], strides = [1, 1]} : vector<24x32xf32> to vector<1x32xf32>
    %307 = vector.shape_cast %306 : vector<1x32xf32> to vector<32xf32>
    %308 = vector.extract_strided_slice %0 {offsets = [17, 0], sizes = [1, 32], strides = [1, 1]} : vector<24x32xf32> to vector<1x32xf32>
    %309 = vector.shape_cast %308 : vector<1x32xf32> to vector<32xf32>
    %cst_74 = arith.constant dense<0.000000e+00> : vector<16xf32>
    %310 = vector.multi_reduction <add>, %304, %cst_74 [1] : vector<16x32xf32> to vector<16xf32>
    %311 = vector.shape_cast %310 : vector<16xf32> to vector<16x1xf32>
    %cst_75 = arith.constant 3.200000e+01 : f32
    %312 = vector.broadcast %cst_75 : f32 to vector<16x1xf32>
    %313 = arith.divf %311, %312 : vector<16x1xf32>
    %314 = vector.broadcast %313 : vector<16x1xf32> to vector<16x32xf32>
    %315 = arith.subf %304, %314 : vector<16x32xf32>
    %316 = arith.mulf %315, %315 : vector<16x32xf32>
    %cst_76 = arith.constant dense<0.000000e+00> : vector<16xf32>
    %317 = vector.multi_reduction <add>, %316, %cst_76 [1] : vector<16x32xf32> to vector<16xf32>
    %318 = vector.shape_cast %317 : vector<16xf32> to vector<16x1xf32>
    %cst_77 = arith.constant 3.200000e+01 : f32
    %319 = vector.broadcast %cst_77 : f32 to vector<16x1xf32>
    %320 = arith.divf %318, %319 : vector<16x1xf32>
    %cst_78 = arith.constant 9.99999974E-6 : f32
    %321 = vector.broadcast %cst_78 : f32 to vector<16x1xf32>
    %322 = arith.addf %320, %321 : vector<16x1xf32>
    %323 = math.rsqrt %322 : vector<16x1xf32>
    %324 = vector.broadcast %323 : vector<16x1xf32> to vector<16x32xf32>
    %325 = arith.mulf %315, %324 : vector<16x32xf32>
    %326 = vector.shape_cast %307 : vector<32xf32> to vector<1x32xf32>
    %327 = vector.broadcast %326 : vector<1x32xf32> to vector<16x32xf32>
    %328 = arith.mulf %325, %327 : vector<16x32xf32>
    %329 = vector.shape_cast %309 : vector<32xf32> to vector<1x32xf32>
    %330 = vector.broadcast %329 : vector<1x32xf32> to vector<16x32xf32>
    %331 = arith.addf %328, %330 : vector<16x32xf32>
    %332 = vector.extract_strided_slice %0 {offsets = [18, 0], sizes = [1, 32], strides = [1, 1]} : vector<24x32xf32> to vector<1x32xf32>
    %333 = vector.shape_cast %332 : vector<1x32xf32> to vector<32xf32>
    %334 = vector.extract_strided_slice %0 {offsets = [19, 0], sizes = [1, 32], strides = [1, 1]} : vector<24x32xf32> to vector<1x32xf32>
    %335 = vector.shape_cast %334 : vector<1x32xf32> to vector<32xf32>
    %cst_79 = arith.constant dense<0.000000e+00> : vector<16xf32>
    %336 = vector.multi_reduction <add>, %305, %cst_79 [1] : vector<16x32xf32> to vector<16xf32>
    %337 = vector.shape_cast %336 : vector<16xf32> to vector<16x1xf32>
    %cst_80 = arith.constant 3.200000e+01 : f32
    %338 = vector.broadcast %cst_80 : f32 to vector<16x1xf32>
    %339 = arith.divf %337, %338 : vector<16x1xf32>
    %340 = vector.broadcast %339 : vector<16x1xf32> to vector<16x32xf32>
    %341 = arith.subf %305, %340 : vector<16x32xf32>
    %342 = arith.mulf %341, %341 : vector<16x32xf32>
    %cst_81 = arith.constant dense<0.000000e+00> : vector<16xf32>
    %343 = vector.multi_reduction <add>, %342, %cst_81 [1] : vector<16x32xf32> to vector<16xf32>
    %344 = vector.shape_cast %343 : vector<16xf32> to vector<16x1xf32>
    %cst_82 = arith.constant 3.200000e+01 : f32
    %345 = vector.broadcast %cst_82 : f32 to vector<16x1xf32>
    %346 = arith.divf %344, %345 : vector<16x1xf32>
    %cst_83 = arith.constant 9.99999974E-6 : f32
    %347 = vector.broadcast %cst_83 : f32 to vector<16x1xf32>
    %348 = arith.addf %346, %347 : vector<16x1xf32>
    %349 = math.rsqrt %348 : vector<16x1xf32>
    %350 = vector.broadcast %349 : vector<16x1xf32> to vector<16x32xf32>
    %351 = arith.mulf %341, %350 : vector<16x32xf32>
    %352 = vector.shape_cast %333 : vector<32xf32> to vector<1x32xf32>
    %353 = vector.broadcast %352 : vector<1x32xf32> to vector<16x32xf32>
    %354 = arith.mulf %351, %353 : vector<16x32xf32>
    %355 = vector.shape_cast %335 : vector<32xf32> to vector<1x32xf32>
    %356 = vector.broadcast %355 : vector<1x32xf32> to vector<16x32xf32>
    %357 = arith.addf %354, %356 : vector<16x32xf32>
    %c4_84 = arith.constant 4 : index
    %358 = memref.load %arg3[%c4_84] : memref<6xf32, #tpu.memory_space<smem>>
    %359 = arith.mulf %331, %331 : vector<16x32xf32>
    %360 = arith.mulf %357, %357 : vector<16x32xf32>
    %361 = arith.addf %359, %360 : vector<16x32xf32>
    %cst_85 = arith.constant 9.99999996E-13 : f32
    %362 = vector.broadcast %cst_85 : f32 to vector<16x32xf32>
    %363 = arith.addf %361, %362 : vector<16x32xf32>
    %364 = math.rsqrt %363 : vector<16x32xf32>
    %365 = vector.broadcast %358 : f32 to vector<16x32xf32>
    %366 = arith.mulf %365, %364 : vector<16x32xf32>
    %cst_86 = arith.constant 1.000000e+00 : f32
    %367 = vector.broadcast %cst_86 : f32 to vector<16x32xf32>
    %368 = arith.subf %367, %366 : vector<16x32xf32>
    %cst_87 = arith.constant 0.000000e+00 : f32
    %369 = vector.broadcast %cst_87 : f32 to vector<16x32xf32>
    %370 = arith.maximumf %368, %369 : vector<16x32xf32>
    %371 = arith.mulf %331, %370 : vector<16x32xf32>
    %372 = arith.mulf %357, %370 : vector<16x32xf32>
    %373 = tpu.concatenate %371, %372 in 1 : vector<16x32xf32>, vector<16x32xf32> -> vector<16x64xf32>
    %c5 = arith.constant 5 : index
    %c0_88 = arith.constant 0 : index
    %c0_89 = arith.constant 0 : index
    %374 = vector.load %arg1[%c5, %c0_88, %c0_89] : memref<7x64x64xf32, #tpu.memory_space<vmem>>, vector<1x64x64xf32>
    %375 = vector.shape_cast %374 : vector<1x64x64xf32> to vector<64x64xf32>
    %cst_90 = arith.constant dense<0.000000e+00> : vector<16x64xf32>
    %376 = tpu.matmul %373, %375, %cst_90 {dimension_numbers = #tpu.dot_dimension_numbers<[1], [0], [0], [1], [0, 0, 1, 1], [], []>} : vector<16x64xf32>, vector<64x64xf32>, vector<16x64xf32> -> vector<16x64xf32>
    %377 = vector.extract_strided_slice %376 {offsets = [0, 0], sizes = [16, 32], strides = [1, 1]} : vector<16x64xf32> to vector<16x32xf32>
    %378 = vector.extract_strided_slice %376 {offsets = [0, 32], sizes = [16, 32], strides = [1, 1]} : vector<16x64xf32> to vector<16x32xf32>
    %379 = vector.extract_strided_slice %0 {offsets = [20, 0], sizes = [1, 32], strides = [1, 1]} : vector<24x32xf32> to vector<1x32xf32>
    %380 = vector.shape_cast %379 : vector<1x32xf32> to vector<32xf32>
    %381 = vector.extract_strided_slice %0 {offsets = [21, 0], sizes = [1, 32], strides = [1, 1]} : vector<24x32xf32> to vector<1x32xf32>
    %382 = vector.shape_cast %381 : vector<1x32xf32> to vector<32xf32>
    %cst_91 = arith.constant dense<0.000000e+00> : vector<16xf32>
    %383 = vector.multi_reduction <add>, %377, %cst_91 [1] : vector<16x32xf32> to vector<16xf32>
    %384 = vector.shape_cast %383 : vector<16xf32> to vector<16x1xf32>
    %cst_92 = arith.constant 3.200000e+01 : f32
    %385 = vector.broadcast %cst_92 : f32 to vector<16x1xf32>
    %386 = arith.divf %384, %385 : vector<16x1xf32>
    %387 = vector.broadcast %386 : vector<16x1xf32> to vector<16x32xf32>
    %388 = arith.subf %377, %387 : vector<16x32xf32>
    %389 = arith.mulf %388, %388 : vector<16x32xf32>
    %cst_93 = arith.constant dense<0.000000e+00> : vector<16xf32>
    %390 = vector.multi_reduction <add>, %389, %cst_93 [1] : vector<16x32xf32> to vector<16xf32>
    %391 = vector.shape_cast %390 : vector<16xf32> to vector<16x1xf32>
    %cst_94 = arith.constant 3.200000e+01 : f32
    %392 = vector.broadcast %cst_94 : f32 to vector<16x1xf32>
    %393 = arith.divf %391, %392 : vector<16x1xf32>
    %cst_95 = arith.constant 9.99999974E-6 : f32
    %394 = vector.broadcast %cst_95 : f32 to vector<16x1xf32>
    %395 = arith.addf %393, %394 : vector<16x1xf32>
    %396 = math.rsqrt %395 : vector<16x1xf32>
    %397 = vector.broadcast %396 : vector<16x1xf32> to vector<16x32xf32>
    %398 = arith.mulf %388, %397 : vector<16x32xf32>
    %399 = vector.shape_cast %380 : vector<32xf32> to vector<1x32xf32>
    %400 = vector.broadcast %399 : vector<1x32xf32> to vector<16x32xf32>
    %401 = arith.mulf %398, %400 : vector<16x32xf32>
    %402 = vector.shape_cast %382 : vector<32xf32> to vector<1x32xf32>
    %403 = vector.broadcast %402 : vector<1x32xf32> to vector<16x32xf32>
    %404 = arith.addf %401, %403 : vector<16x32xf32>
    %405 = vector.extract_strided_slice %0 {offsets = [22, 0], sizes = [1, 32], strides = [1, 1]} : vector<24x32xf32> to vector<1x32xf32>
    %406 = vector.shape_cast %405 : vector<1x32xf32> to vector<32xf32>
    %407 = vector.extract_strided_slice %0 {offsets = [23, 0], sizes = [1, 32], strides = [1, 1]} : vector<24x32xf32> to vector<1x32xf32>
    %408 = vector.shape_cast %407 : vector<1x32xf32> to vector<32xf32>
    %cst_96 = arith.constant dense<0.000000e+00> : vector<16xf32>
    %409 = vector.multi_reduction <add>, %378, %cst_96 [1] : vector<16x32xf32> to vector<16xf32>
    %410 = vector.shape_cast %409 : vector<16xf32> to vector<16x1xf32>
    %cst_97 = arith.constant 3.200000e+01 : f32
    %411 = vector.broadcast %cst_97 : f32 to vector<16x1xf32>
    %412 = arith.divf %410, %411 : vector<16x1xf32>
    %413 = vector.broadcast %412 : vector<16x1xf32> to vector<16x32xf32>
    %414 = arith.subf %378, %413 : vector<16x32xf32>
    %415 = arith.mulf %414, %414 : vector<16x32xf32>
    %cst_98 = arith.constant dense<0.000000e+00> : vector<16xf32>
    %416 = vector.multi_reduction <add>, %415, %cst_98 [1] : vector<16x32xf32> to vector<16xf32>
    %417 = vector.shape_cast %416 : vector<16xf32> to vector<16x1xf32>
    %cst_99 = arith.constant 3.200000e+01 : f32
    %418 = vector.broadcast %cst_99 : f32 to vector<16x1xf32>
    %419 = arith.divf %417, %418 : vector<16x1xf32>
    %cst_100 = arith.constant 9.99999974E-6 : f32
    %420 = vector.broadcast %cst_100 : f32 to vector<16x1xf32>
    %421 = arith.addf %419, %420 : vector<16x1xf32>
    %422 = math.rsqrt %421 : vector<16x1xf32>
    %423 = vector.broadcast %422 : vector<16x1xf32> to vector<16x32xf32>
    %424 = arith.mulf %414, %423 : vector<16x32xf32>
    %425 = vector.shape_cast %406 : vector<32xf32> to vector<1x32xf32>
    %426 = vector.broadcast %425 : vector<1x32xf32> to vector<16x32xf32>
    %427 = arith.mulf %424, %426 : vector<16x32xf32>
    %428 = vector.shape_cast %408 : vector<32xf32> to vector<1x32xf32>
    %429 = vector.broadcast %428 : vector<1x32xf32> to vector<16x32xf32>
    %430 = arith.addf %427, %429 : vector<16x32xf32>
    %431 = arith.addf %404, %298 : vector<16x32xf32>
    %432 = arith.addf %430, %299 : vector<16x32xf32>
    %c5_101 = arith.constant 5 : index
    %433 = memref.load %arg3[%c5_101] : memref<6xf32, #tpu.memory_space<smem>>
    %434 = arith.mulf %431, %431 : vector<16x32xf32>
    %435 = arith.mulf %432, %432 : vector<16x32xf32>
    %436 = arith.addf %434, %435 : vector<16x32xf32>
    %cst_102 = arith.constant 9.99999996E-13 : f32
    %437 = vector.broadcast %cst_102 : f32 to vector<16x32xf32>
    %438 = arith.addf %436, %437 : vector<16x32xf32>
    %439 = math.rsqrt %438 : vector<16x32xf32>
    %440 = vector.broadcast %433 : f32 to vector<16x32xf32>
    %441 = arith.mulf %440, %439 : vector<16x32xf32>
    %cst_103 = arith.constant 1.000000e+00 : f32
    %442 = vector.broadcast %cst_103 : f32 to vector<16x32xf32>
    %443 = arith.subf %442, %441 : vector<16x32xf32>
    %cst_104 = arith.constant 0.000000e+00 : f32
    %444 = vector.broadcast %cst_104 : f32 to vector<16x32xf32>
    %445 = arith.maximumf %443, %444 : vector<16x32xf32>
    %446 = arith.mulf %431, %445 : vector<16x32xf32>
    %447 = arith.mulf %432, %445 : vector<16x32xf32>
    %448 = tpu.concatenate %446, %447 in 1 : vector<16x32xf32>, vector<16x32xf32> -> vector<16x64xf32>
    %c6 = arith.constant 6 : index
    %c0_105 = arith.constant 0 : index
    %c0_106 = arith.constant 0 : index
    %449 = vector.load %arg1[%c6, %c0_105, %c0_106] : memref<7x64x64xf32, #tpu.memory_space<vmem>>, vector<1x64x64xf32>
    %450 = vector.shape_cast %449 : vector<1x64x64xf32> to vector<64x64xf32>
    %cst_107 = arith.constant dense<0.000000e+00> : vector<16x64xf32>
    %451 = tpu.matmul %448, %450, %cst_107 {dimension_numbers = #tpu.dot_dimension_numbers<[1], [0], [0], [1], [0, 0, 1, 1], [], []>} : vector<16x64xf32>, vector<64x64xf32>, vector<16x64xf32> -> vector<16x64xf32>
    %452 = vector.extract_strided_slice %451 {offsets = [0, 0], sizes = [16, 32], strides = [1, 1]} : vector<16x64xf32> to vector<16x32xf32>
    %453 = vector.extract_strided_slice %451 {offsets = [0, 32], sizes = [16, 32], strides = [1, 1]} : vector<16x64xf32> to vector<16x32xf32>
    %454 = tpu.concatenate %452, %453 in 1 : vector<16x32xf32>, vector<16x32xf32> -> vector<16x64xf32>
    %c0_108 = arith.constant 0 : index
    %c0_109 = arith.constant 0 : index
    %455 = vector.load %arg5[%c0_108, %c0_109] : memref<16x64xf32, #tpu.memory_space<vmem>>, vector<16x64xf32>
    tpu.vector_store %arg5[%c0_108, %c0_109], %454 {strides = array<i32>} : memref<16x64xf32, #tpu.memory_space<vmem>>, vector<16x64xf32>,
    return
  }
  func.func @transform_0(%arg0: i32) -> (i32, i32, i32) {
    %c0_i32 = arith.constant 0 : i32
    %c0_i32_0 = arith.constant 0 : i32
    %c0_i32_1 = arith.constant 0 : i32
    %c0_i32_2 = arith.constant 0 : i32
    return %c0_i32, %c0_i32_0, %c0_i32_1 : i32, i32, i32
  }
  func.func @transform_1(%arg0: i32) -> (i32, i32) {
    %c0_i32 = arith.constant 0 : i32
    %c0_i32_0 = arith.constant 0 : i32
    %c0_i32_1 = arith.constant 0 : i32
    return %c0_i32, %c0_i32_0 : i32, i32
  }
  func.func @transform_2(%arg0: i32) -> i32 {
    %c0_i32 = arith.constant 0 : i32
    %c0_i32_0 = arith.constant 0 : i32
    return %c0_i32 : i32
  }
  func.func @transform_3(%arg0: i32) -> (i32, i32) {
    %c0_i32 = arith.constant 0 : i32
    %c0_i32_0 = arith.constant 0 : i32
    return %arg0, %c0_i32 : i32, i32
  }
  func.func @transform_4(%arg0: i32) -> (i32, i32) {
    %c0_i32 = arith.constant 0 : i32
    %c0_i32_0 = arith.constant 0 : i32
    return %arg0, %c0_i32 : i32, i32
  }
}

</mosaic_0001>

<llo_original>
// kernel: tpu_custom_call.1
$region0: #{tpu_custom_call.1}
  #allocation0 [shape = 'u32[]', space=smem, size = 0x4, offset = 0x4, fixed_abs, tag = 'smem constant byte address 0x4 - core index']
  #allocation1 [shape = 'u32[144,128]{1,0:T(1,128)}', space=vmem, size = 0x12000, scoped, tag = 'internal scratch']
  %s0 = inlined_call_operand.hbm [shape: f32[7,64,64], index: 0, kind: input, shape index: {}]
  %s1 = inlined_call_operand.hbm [shape: f32[24,32], index: 1, kind: input, shape index: {}]
  %s2 = inlined_call_operand.vmem [shape: f32[6], index: 2, kind: input, shape index: {}]
  %s3 = inlined_call_operand.hbm [shape: f32[16,64], index: 3, kind: input, shape index: {}]
  %s4 = inlined_call_operand.hbm [shape: f32[16,64], index: 4, kind: output, shape index: {}]
  %s5 = sld [smem:[#allocation0]]
  $region42: #{tpu_custom_call.1} parent=0
    _
  %s7 = ssub.s32 1, %s5
  %s8 = scalar_select 0, %s7, %s5
  $region1: #{tpu_custom_call.1} parent=0
    #allocation2 [shape = 'u8[229376]{0}', space=vmem, size = 0x38000, scoped, tag = 'input window, operand 0, single buffered']
    #allocation3 [shape = 's32[1]{0}', space=sflag, size = 0x4, scoped, tag = 'scoped memory for tpu_custom_call.1']
    #allocation4 [shape = 's32[1]{0}', space=sflag, size = 0x4, scoped, tag = 'scoped memory for tpu_custom_call.1']
    #allocation5 [shape = 's32[1]{0}', space=sflag, size = 0x4, scoped, tag = 'scoped memory for tpu_custom_call.1']
    #allocation6 [shape = 'u8[12288]{0}', space=vmem, size = 0x3000, scoped, tag = 'input window, operand 1, single buffered']
    #allocation7 [shape = 's32[1]{0}', space=sflag, size = 0x4, scoped, tag = 'scoped memory for tpu_custom_call.1']
    #allocation8 [shape = 'u8[512]{0}', space=smem, size = 0x200, scoped, tag = 'input window, operand 2, single buffered']
    #allocation9 [shape = 'u8[8192]{0}', space=vmem, size = 0x2000, scoped, tag = 'input window, operand 3, single buffered']
    #allocation10 [shape = 'u8[8192]{0}', space=vmem, size = 0x2000, scoped, tag = 'output window, operand 0, single buffered']
    %9 = vsyncpa [#allocation3], 0
    %10 = vsyncpa [#allocation7], 0
    %11 = vsyncpa [#allocation5], 0
    %12 = vsyncpa [#allocation4], 0
    // Predicated region
    $region2: #{tpu_custom_call.1} parent=1 // pred_check
      _
    $region3: #{tpu_custom_call.1} parent=1 // pred_check_branch
      %14 = sbr.rel (0) target = $region5
    $region4: #{tpu_custom_call.1} parent=1 // pred_region
      %s16 = ssub.s32 7168, 7168
      %17 = vsyncadd [#allocation3], %s16
      %s18 = sshll.u32 [#allocation2], 4
      %s19 = int_to_ptr.vmem [resolvable:$true] %s18
      %24 = dma.hbm_to_vmem [thread:$0]  %s0, 7168, %s19, [#allocation3], 128, 128, 8
    $region5: #{tpu_custom_call.1} parent=1 // pred_fallthru
      _
    // Predicated region
    $region6: #{tpu_custom_call.1} parent=1 // pred_check
      _
    $region7: #{tpu_custom_call.1} parent=1 // pred_check_branch
      %26 = sbr.rel (0) target = $region9
    $region8: #{tpu_custom_call.1} parent=1 // pred_region
      %s28 = ssub.s32 384, 384
      %29 = vsyncadd [#allocation7], %s28
      %s30 = sshll.u32 [#allocation6], 4
      %s31 = int_to_ptr.vmem [resolvable:$true] %s30
      %36 = dma.hbm_to_vmem [thread:$0]  %s1, 384, %s31, [#allocation7], 128, 128, 8
    $region9: #{tpu_custom_call.1} parent=1 // pred_fallthru
      _
    // Predicated region
    $region10: #{tpu_custom_call.1} parent=1 // pred_check
      _
    $region11: #{tpu_custom_call.1} parent=1 // pred_check_branch
      %38 = sbr.rel (0) target = $region13
    $region12: #{tpu_custom_call.1} parent=1 // pred_region
      %s40 = ssub.s32 16, 16
      %41 = vsyncadd [#allocation5], %s40
      %s43 = sshll.u32 %s2, 4
      %s44 = int_to_ptr.vmem [resolvable:$true] %s43
      %46 = dma.vmem_to_smem %s44, 16, [#allocation8], [#allocation5]
    $region13: #{tpu_custom_call.1} parent=1 // pred_fallthru
      _
    // Predicated region
    $region14: #{tpu_custom_call.1} parent=1 // pred_check
      _
    $region15: #{tpu_custom_call.1} parent=1 // pred_check_branch
      %48 = sbr.rel (0) target = $region17
    $region16: #{tpu_custom_call.1} parent=1 // pred_region
      %s50 = ssub.s32 256, 256
      %51 = vsyncadd [#allocation7], %s50
      %s52 = sshll.u32 [#allocation9], 4
      %s53 = int_to_ptr.vmem [resolvable:$true] %s52
      %58 = dma.hbm_to_vmem [thread:$0]  %s3, 256, %s53, [#allocation7], 128, 128, 8
    $region17: #{tpu_custom_call.1} parent=1 // pred_fallthru
      _
    // Predicated region
    $region18: #{tpu_custom_call.1} parent=1 // pred_check
      _
    $region19: #{tpu_custom_call.1} parent=1 // pred_check_branch
      %60 = sbr.rel (0) target = $region21
    $region20: #{tpu_custom_call.1} parent=1 // pred_region
      %61 = dma.done [#allocation3], 7168
    $region21: #{tpu_custom_call.1} parent=1 // pred_fallthru
      _
    // Predicated region
    $region22: #{tpu_custom_call.1} parent=1 // pred_check
      _
    $region23: #{tpu_custom_call.1} parent=1 // pred_check_branch
      %63 = sbr.rel (0) target = $region25
    $region24: #{tpu_custom_call.1} parent=1 // pred_region
      %64 = dma.done [#allocation7], 384
    $region25: #{tpu_custom_call.1} parent=1 // pred_fallthru
      _
    // Predicated region
    $region26: #{tpu_custom_call.1} parent=1 // pred_check
      _
    $region27: #{tpu_custom_call.1} parent=1 // pred_check_branch
      %66 = sbr.rel (0) target = $region29
    $region28: #{tpu_custom_call.1} parent=1 // pred_region
      %67 = dma.done [#allocation5], 16
    $region29: #{tpu_custom_call.1} parent=1 // pred_fallthru
      _
    // Predicated region
    $region30: #{tpu_custom_call.1} parent=1 // pred_check
      _
    $region31: #{tpu_custom_call.1} parent=1 // pred_check_branch
      %69 = sbr.rel (0) target = $region33
    $region32: #{tpu_custom_call.1} parent=1 // pred_region
      %70 = dma.done [#allocation7], 256
    $region33: #{tpu_custom_call.1} parent=1 // pred_fallthru
      _
    %71 = sfence
    %v72 = vld [vmem:[#allocation6] sm:$0xff]
    %v73 = vld [vmem:[#allocation6 + $0x8] sm:$0xff]
    %v74 = vld [vmem:[#allocation6 + $0x10] sm:$0xff]
    %v75 = vld [vmem:[#allocation9] sm:$0xff]
    %v76 = vld [vmem:[#allocation9 + $0x8] sm:$0xff]
    %v77 = vld [vmem:[#allocation2] sm:$0xff]
    %v78 = vld [vmem:[#allocation2 + $0x8] sm:$0xff]
    %v79 = vld [vmem:[#allocation2 + $0x10] sm:$0xff]
    %v80 = vld [vmem:[#allocation2 + $0x18] sm:$0xff]
    %v81 = vld [vmem:[#allocation2 + $0x20] sm:$0xff]
    %v82 = vld [vmem:[#allocation2 + $0x28] sm:$0xff]
    %v83 = vld [vmem:[#allocation2 + $0x30] sm:$0xff]
    %v84 = vld [vmem:[#allocation2 + $0x38] sm:$0xff]
    %vm85 = vcmask 523264
    %v87 = vsel %vm85, %v75, 0
    %v90 = vsel %vm85, %v76, 0
    %92 = vmatprep.subr.mxu0 0.0
    %93 = vmatpush1.msra.mxu0 %v77
    %94 = vmatprep.subr.mxu0 0.0
    %95 = vmatpush1.msra.mxu0 %v78
    %96 = vmatprep.subr.mxu0 0.0
    %97 = vmatpush1.msra.mxu0 %v79
    %98 = vmatprep.subr.mxu0 0.0
    %99 = vmatpush1.msra.mxu0 %v80
    %100 = vmatprep.subr.mxu0 0.0
    %101 = vmatpush1.msra.mxu0 %v81
    %102 = vmatprep.subr.mxu0 0.0
    %103 = vmatpush1.msra.mxu0 %v82
    %104 = vmatprep.subr.mxu0 0.0
    %105 = vmatpush1.msra.mxu0 %v83
    %106 = vmatprep.subr.mxu0 0.0
    %107 = vmatpush1.msra.mxu0 %v84
    %108 = vmatprep.subr.mxu0 0.0
    %109 = vmatpush1.msra.mxu0 0.0
    %110 = vmatprep.subr.mxu0 0.0
    %111 = vmatpush1.msra.mxu0 0.0
    %112 = vmatprep.subr.mxu0 0.0
    %113 = vmatpush1.msra.mxu0 0.0
    %114 = vmatprep.subr.mxu0 0.0
    %115 = vmatpush1.msra.mxu0 0.0
    %116 = vmatprep.subr.mxu0 0.0
    %117 = vmatpush1.msra.mxu0 0.0
    %118 = vmatprep.subr.mxu0 0.0
    %119 = vmatpush1.msra.mxu0 0.0
    %120 = vmatprep.subr.mxu0 0.0
    %121 = vmatpush1.msra.mxu0 0.0
    %122 = vmatprep.subr.mxu0 0.0
    %123 = vmatpush1.msra.mxu0 0.0
    %124 = vmatprep.subr.mxu0 0.0
    %125 = vmatpush1.msra.mxu0 0.0
    %126 = vmatprep.subr.mxu0 0.0
    %127 = vmatpush1.msra.mxu0 0.0
    %128 = vmatprep.subr.mxu0 0.0
    %129 = vmatpush1.msra.mxu0 0.0
    %130 = vmatprep.subr.mxu0 0.0
    %131 = vmatpush1.msra.mxu0 0.0
    %132 = vmatprep.subr.mxu0 0.0
    %133 = vmatpush1.msra.mxu0 0.0
    %134 = vmatprep.subr.mxu0 0.0
    %135 = vmatpush1.msra.mxu0 0.0
    %136 = vmatprep.subr.mxu0 0.0
    %137 = vmatpush1.msra.mxu0 0.0
    %138 = vmatprep.subr.mxu0 0.0
    %139 = vmatpush1.msra.mxu0 0.0
    %140 = vmatprep.subr.mxu0 0.0
    %141 = vmatpush1.msra.mxu0 0.0
    %142 = vmatprep.subr.mxu0 0.0
    %143 = vmatpush1.msra.mxu0 0.0
    %144 = vmatprep.subr.mxu0 0.0
    %145 = vmatpush1.msra.mxu0 0.0
    %146 = vmatprep.subr.mxu0 0.0
    %147 = vmatpush1.msra.mxu0 0.0
    %148 = vmatprep.subr.mxu0 0.0
    %149 = vmatpush1.msra.mxu0 0.0
    %150 = vmatprep.subr.mxu0 0.0
    %151 = vmatpush1.msra.mxu0 0.0
    %152 = vmatprep.subr.mxu0 0.0
    %153 = vmatpush1.msra.mxu0 0.0
    %154 = vmatprep.subr.mxu0 0.0
    %155 = vmatpush1.msra.mxu0 0.0
    %156 = vmatprep.mubr.f32.mxu0 0.0
    %157 = vmatmul.mubr.f32.gmra.mrb[0].mxu0 %v87
    %v158 = vpop.f32.mrb[0].mxu0
    %v159 = vadd.f32 0.0, %v158
    %v160 = vpop.f32.mrb[0].mxu0
    %161 = vmatprep.mubr.f32.mxu0 0.0
    %162 = vmatmul.mubr.f32.gmra.mrb[0].mxu0 %v90
    %v163 = vpop.f32.mrb[0].mxu0
    %v164 = vadd.f32 0.0, %v163
    %v165 = vpop.f32.mrb[0].mxu0
    %166 = vdwg.mxu0
    %vm167 = vcmask 261120
    %v168 = vsel %vm167, %v159, 0.0
    %169 = vadd.xlane.f32.xlu0 %v168
    %v170 = vpop.xlane.xlu0 %169
    %v171 = vsel %vm167, %v164, 0.0
    %172 = vadd.xlane.f32.xlu0 %v171
    %v173 = vpop.xlane.xlu0 %172
    %v174 = vrcp.pop 32.0
    %v175 = vmul.f32 %v170, %v174
    %v176 = vmul.f32 %v173, %v174
    %v177 = vsub.f32 %v159, %v175
    %v178 = vsub.f32 %v164, %v176
    %v179 = vmul.f32 %v177, %v177
    %v180 = vmul.f32 %v178, %v178
    %v181 = vsel %vm167, %v179, 0.0
    %182 = vadd.xlane.f32.xlu0 %v181
    %v183 = vpop.xlane.xlu0 %182
    %v184 = vsel %vm167, %v180, 0.0
    %185 = vadd.xlane.f32.xlu0 %v184
    %v186 = vpop.xlane.xlu0 %185
    %v187 = vmul.f32 %v183, %v174
    %v188 = vmul.f32 %v186, %v174
    %v189 = vadd.f32 %v187, 1e-05
    %v190 = vadd.f32 %v188, 1e-05
    %v191 = vrsqrt.pop %v189
    %v192 = vrsqrt.pop %v190
    %v193 = vmul.f32 %v177, %v191
    %v194 = vmul.f32 %v178, %v192
    %v195 = vlaneseq
    %v196 = vshrl.u32 %v195, 7
    %v197 = vsub.s32 0, %v196
    %v198 = vrot.slane %v72, %v197
    %v199 = vmul.f32 %v193, %v198
    %v200 = vmul.f32 %v194, %v198
    %v201 = vlaneseq
    %v202 = vshrl.u32 %v201, 7
    %v203 = vsub.s32 1, %v202
    %v204 = vrot.slane %v72, %v203
    %v205 = vadd.f32 %v199, %v204
    %v206 = vadd.f32 %v200, %v204
    %209 = vrot.lane.b32.xlu0 %v159, 96
    %v210 = vpop.permute.xlu0 %209
    %211 = vrot.lane.b32.xlu0 %v164, 96
    %v212 = vpop.permute.xlu0 %211
    %v215 = vsel %vm167, %v210, 0.0
    %216 = vadd.xlane.f32.xlu0 %v215
    %v217 = vpop.xlane.xlu0 %216
    %v218 = vsel %vm167, %v212, 0.0
    %219 = vadd.xlane.f32.xlu0 %v218
    %v220 = vpop.xlane.xlu0 %219
    %v221 = vmul.f32 %v217, %v174
    %v222 = vmul.f32 %v220, %v174
    %v223 = vsub.f32 %v159, %v221
    %v224 = vsub.f32 %v164, %v222
    %v225 = vmul.f32 %v223, %v223
    %v226 = vmul.f32 %v224, %v224
    %229 = vrot.lane.b32.xlu0 %v225, 96
    %v230 = vpop.permute.xlu0 %229
    %231 = vrot.lane.b32.xlu0 %v226, 96
    %v232 = vpop.permute.xlu0 %231
    %v235 = vsel %vm167, %v230, 0.0
    %236 = vadd.xlane.f32.xlu0 %v235
    %v237 = vpop.xlane.xlu0 %236
    %v238 = vsel %vm167, %v232, 0.0
    %239 = vadd.xlane.f32.xlu0 %v238
    %v240 = vpop.xlane.xlu0 %239
    %v241 = vmul.f32 %v237, %v174
    %v242 = vmul.f32 %v240, %v174
    %v243 = vadd.f32 %v241, 1e-05
    %v244 = vadd.f32 %v242, 1e-05
    %v245 = vrsqrt.pop %v243
    %v246 = vrsqrt.pop %v244
    %v247 = vmul.f32 %v223, %v245
    %v248 = vmul.f32 %v224, %v246
    %v249 = vlaneseq
    %v250 = vshrl.u32 %v249, 7
    %v251 = vsub.s32 2, %v250
    %v252 = vrot.slane %v72, %v251
    %254 = vrot.lane.b32.xlu0 %v252, 32
    %v255 = vpop.permute.xlu0 %254
    %v257 = vmul.f32 %v247, %v255
    %v258 = vmul.f32 %v248, %v255
    %v259 = vlaneseq
    %v260 = vshrl.u32 %v259, 7
    %v261 = vsub.s32 3, %v260
    %v262 = vrot.slane %v72, %v261
    %264 = vrot.lane.b32.xlu0 %v262, 32
    %v265 = vpop.permute.xlu0 %264
    %v267 = vadd.f32 %v257, %v265
    %v268 = vadd.f32 %v258, %v265
    %s269 = sld [smem:[#allocation8]]
    %v270 = vmul.f32 %v205, %v205
    %v271 = vmul.f32 %v206, %v206
    %v272 = vmul.f32 %v267, %v267
    %v273 = vmul.f32 %v268, %v268
    %276 = vrot.lane.b32.xlu0 %v272, 96
    %v277 = vpop.permute.xlu0 %276
    %278 = vrot.lane.b32.xlu0 %v273, 96
    %v279 = vpop.permute.xlu0 %278
    %v282 = vadd.f32 %v270, %v277
    %v283 = vadd.f32 %v271, %v279
    %v284 = vadd.f32 %v282, 1e-12
    %v285 = vadd.f32 %v283, 1e-12
    %v286 = vrsqrt.pop %v284
    %v287 = vrsqrt.pop %v285
    %v288 = vstv %s269
    %v289 = vmul.f32 %v288, %v286
    %v290 = vmul.f32 %v288, %v287
    %v291 = vsub.f32 1.0, %v289
    %v292 = vsub.f32 1.0, %v290
    %v293 = vmax.f32 %v291, 0.0
    %v294 = vmax.f32 %v292, 0.0
    %v295 = vmul.f32 %v205, %v293
    %v296 = vmul.f32 %v206, %v294
    %299 = vrot.lane.b32.xlu0 %v293, 32
    %v300 = vpop.permute.xlu0 %299
    %301 = vrot.lane.b32.xlu0 %v294, 32
    %v302 = vpop.permute.xlu0 %301
    %v305 = vmul.f32 %v267, %v300
    %v306 = vmul.f32 %v268, %v302
    %v307 = vsel %vm167, %v295, %v305
    %v308 = vsel %vm167, %v296, %v306
    %s309 = scalar_lea.vmem [#allocation2], 64
    %v310 = vld [vmem:[%s309] sm:$0xff]
    %v311 = vld [vmem:[%s309 + $0x8] sm:$0xff]
    %v312 = vld [vmem:[%s309 + $0x10] sm:$0xff]
    %v313 = vld [vmem:[%s309 + $0x18] sm:$0xff]
    %v314 = vld [vmem:[%s309 + $0x20] sm:$0xff]
    %v315 = vld [vmem:[%s309 + $0x28] sm:$0xff]
    %v316 = vld [vmem:[%s309 + $0x30] sm:$0xff]
    %v317 = vld [vmem:[%s309 + $0x38] sm:$0xff]
    %v319 = vsel %vm85, %v307, 0
    %v322 = vsel %vm85, %v308, 0
    %324 = vmatprep.subr.mxu0 0.0
    %325 = vmatpush1.msra.mxu0 %v310
    %326 = vmatprep.subr.mxu0 0.0
    %327 = vmatpush1.msra.mxu0 %v311
    %328 = vmatprep.subr.mxu0 0.0
    %329 = vmatpush1.msra.mxu0 %v312
    %330 = vmatprep.subr.mxu0 0.0
    %331 = vmatpush1.msra.mxu0 %v313
    %332 = vmatprep.subr.mxu0 0.0
    %333 = vmatpush1.msra.mxu0 %v314
    %334 = vmatprep.subr.mxu0 0.0
    %335 = vmatpush1.msra.mxu0 %v315
    %336 = vmatprep.subr.mxu0 0.0
    %337 = vmatpush1.msra.mxu0 %v316
    %338 = vmatprep.subr.mxu0 0.0
    %339 = vmatpush1.msra.mxu0 %v317
    %340 = vmatprep.subr.mxu0 0.0
    %341 = vmatpush1.msra.mxu0 0.0
    %342 = vmatprep.subr.mxu0 0.0
    %343 = vmatpush1.msra.mxu0 0.0
    %344 = vmatprep.subr.mxu0 0.0
    %345 = vmatpush1.msra.mxu0 0.0
    %346 = vmatprep.subr.mxu0 0.0
    %347 = vmatpush1.msra.mxu0 0.0
    %348 = vmatprep.subr.mxu0 0.0
    %349 = vmatpush1.msra.mxu0 0.0
    %350 = vmatprep.subr.mxu0 0.0
    %351 = vmatpush1.msra.mxu0 0.0
    %352 = vmatprep.subr.mxu0 0.0
    %353 = vmatpush1.msra.mxu0 0.0
    %354 = vmatprep.subr.mxu0 0.0
    %355 = vmatpush1.msra.mxu0 0.0
    %356 = vmatprep.subr.mxu0 0.0
    %357 = vmatpush1.msra.mxu0 0.0
    %358 = vmatprep.subr.mxu0 0.0
    %359 = vmatpush1.msra.mxu0 0.0
    %360 = vmatprep.subr.mxu0 0.0
    %361 = vmatpush1.msra.mxu0 0.0
    %362 = vmatprep.subr.mxu0 0.0
    %363 = vmatpush1.msra.mxu0 0.0
    %364 = vmatprep.subr.mxu0 0.0
    %365 = vmatpush1.msra.mxu0 0.0
    %366 = vmatprep.subr.mxu0 0.0
    %367 = vmatpush1.msra.mxu0 0.0
    %368 = vmatprep.subr.mxu0 0.0
    %369 = vmatpush1.msra.mxu0 0.0
    %370 = vmatprep.subr.mxu0 0.0
    %371 = vmatpush1.msra.mxu0 0.0
    %372 = vmatprep.subr.mxu0 0.0
    %373 = vmatpush1.msra.mxu0 0.0
    %374 = vmatprep.subr.mxu0 0.0
    %375 = vmatpush1.msra.mxu0 0.0
    %376 = vmatprep.subr.mxu0 0.0
    %377 = vmatpush1.msra.mxu0 0.0
    %378 = vmatprep.subr.mxu0 0.0
    %379 = vmatpush1.msra.mxu0 0.0
    %380 = vmatprep.subr.mxu0 0.0
    %381 = vmatpush1.msra.mxu0 0.0
    %382 = vmatprep.subr.mxu0 0.0
    %383 = vmatpush1.msra.mxu0 0.0
    %384 = vmatprep.subr.mxu0 0.0
    %385 = vmatpush1.msra.mxu0 0.0
    %386 = vmatprep.subr.mxu0 0.0
    %387 = vmatpush1.msra.mxu0 0.0
    %388 = vmatprep.mubr.f32.mxu0 0.0
    %389 = vmatmul.mubr.f32.gmra.mrb[0].mxu0 %v319
    %v390 = vpop.f32.mrb[0].mxu0
    %v391 = vadd.f32 0.0, %v390
    %v392 = vpop.f32.mrb[0].mxu0
    %393 = vmatprep.mubr.f32.mxu0 0.0
    %394 = vmatmul.mubr.f32.gmra.mrb[0].mxu0 %v322
    %v395 = vpop.f32.mrb[0].mxu0
    %v396 = vadd.f32 0.0, %v395
    %v397 = vpop.f32.mrb[0].mxu0
    %398 = vdwg.mxu0
    %v399 = vsel %vm167, %v391, 0.0
    %400 = vadd.xlane.f32.xlu0 %v399
    %v401 = vpop.xlane.xlu0 %400
    %v402 = vsel %vm167, %v396, 0.0
    %403 = vadd.xlane.f32.xlu0 %v402
    %v404 = vpop.xlane.xlu0 %403
    %v405 = vmul.f32 %v401, %v174
    %v406 = vmul.f32 %v404, %v174
    %v407 = vsub.f32 %v391, %v405
    %v408 = vsub.f32 %v396, %v406
    %v409 = vmul.f32 %v407, %v407
    %v410 = vmul.f32 %v408, %v408
    %v411 = vsel %vm167, %v409, 0.0
    %412 = vadd.xlane.f32.xlu0 %v411
    %v413 = vpop.xlane.xlu0 %412
    %v414 = vsel %vm167, %v410, 0.0
    %415 = vadd.xlane.f32.xlu0 %v414
    %v416 = vpop.xlane.xlu0 %415
    %v417 = vmul.f32 %v413, %v174
    %v418 = vmul.f32 %v416, %v174
    %v419 = vadd.f32 %v417, 1e-05
    %v420 = vadd.f32 %v418, 1e-05
    %v421 = vrsqrt.pop %v419
    %v422 = vrsqrt.pop %v420
    %v423 = vmul.f32 %v407, %v421
    %v424 = vmul.f32 %v408, %v422
    %v425 = vlaneseq
    %v426 = vshrl.u32 %v425, 7
    %v427 = vsub.s32 4, %v426
    %v428 = vrot.slane %v72, %v427
    %v429 = vmul.f32 %v423, %v428
    %v430 = vmul.f32 %v424, %v428
    %v431 = vlaneseq
    %v432 = vshrl.u32 %v431, 7
    %v433 = vsub.s32 5, %v432
    %v434 = vrot.slane %v72, %v433
    %v435 = vadd.f32 %v429, %v434
    %v436 = vadd.f32 %v430, %v434
    %439 = vrot.lane.b32.xlu0 %v391, 96
    %v440 = vpop.permute.xlu0 %439
    %441 = vrot.lane.b32.xlu0 %v396, 96
    %v442 = vpop.permute.xlu0 %441
    %v445 = vsel %vm167, %v440, 0.0
    %446 = vadd.xlane.f32.xlu0 %v445
    %v447 = vpop.xlane.xlu0 %446
    %v448 = vsel %vm167, %v442, 0.0
    %449 = vadd.xlane.f32.xlu0 %v448
    %v450 = vpop.xlane.xlu0 %449
    %v451 = vmul.f32 %v447, %v174
    %v452 = vmul.f32 %v450, %v174
    %v453 = vsub.f32 %v391, %v451
    %v454 = vsub.f32 %v396, %v452
    %v455 = vmul.f32 %v453, %v453
    %v456 = vmul.f32 %v454, %v454
    %459 = vrot.lane.b32.xlu0 %v455, 96
    %v460 = vpop.permute.xlu0 %459
    %461 = vrot.lane.b32.xlu0 %v456, 96
    %v462 = vpop.permute.xlu0 %461
    %v465 = vsel %vm167, %v460, 0.0
    %466 = vadd.xlane.f32.xlu0 %v465
    %v467 = vpop.xlane.xlu0 %466
    %v468 = vsel %vm167, %v462, 0.0
    %469 = vadd.xlane.f32.xlu0 %v468
    %v470 = vpop.xlane.xlu0 %469
    %v471 = vmul.f32 %v467, %v174
    %v472 = vmul.f32 %v470, %v174
    %v473 = vadd.f32 %v471, 1e-05
    %v474 = vadd.f32 %v472, 1e-05
    %v475 = vrsqrt.pop %v473
    %v476 = vrsqrt.pop %v474
    %v477 = vmul.f32 %v453, %v475
    %v478 = vmul.f32 %v454, %v476
    %v479 = vlaneseq
    %v480 = vshrl.u32 %v479, 7
    %v481 = vsub.s32 6, %v480
    %v482 = vrot.slane %v72, %v481
    %484 = vrot.lane.b32.xlu0 %v482, 32
    %v485 = vpop.permute.xlu0 %484
    %v487 = vmul.f32 %v477, %v485
    %v488 = vmul.f32 %v478, %v485
    %v489 = vlaneseq
    %v490 = vshrl.u32 %v489, 7
    %v491 = vsub.s32 7, %v490
    %v492 = vrot.slane %v72, %v491
    %494 = vrot.lane.b32.xlu0 %v492, 32
    %v495 = vpop.permute.xlu0 %494
    %v497 = vadd.f32 %v487, %v495
    %v498 = vadd.f32 %v488, %v495
    %v499 = vadd.f32 %v435, %v75
    %v500 = vadd.f32 %v436, %v76
    %v501 = vadd.f32 %v497, %v75
    %v502 = vadd.f32 %v498, %v76
    %s503 = sld [smem:[#allocation8 + $0x1]]
    %v504 = vmul.f32 %v499, %v499
    %v505 = vmul.f32 %v500, %v500
    %v506 = vmul.f32 %v501, %v501
    %v507 = vmul.f32 %v502, %v502
    %510 = vrot.lane.b32.xlu0 %v506, 96
    %v511 = vpop.permute.xlu0 %510
    %512 = vrot.lane.b32.xlu0 %v507, 96
    %v513 = vpop.permute.xlu0 %512
    %v516 = vadd.f32 %v504, %v511
    %v517 = vadd.f32 %v505, %v513
    %v518 = vadd.f32 %v516, 1e-12
    %v519 = vadd.f32 %v517, 1e-12
    %v520 = vrsqrt.pop %v518
    %v521 = vrsqrt.pop %v519
    %v522 = vstv %s503
    %v523 = vmul.f32 %v522, %v520
    %v524 = vmul.f32 %v522, %v521
    %v525 = vsub.f32 1.0, %v523
    %v526 = vsub.f32 1.0, %v524
    %v527 = vmax.f32 %v525, 0.0
    %v528 = vmax.f32 %v526, 0.0
    %v529 = vmul.f32 %v499, %v527
    %v530 = vmul.f32 %v500, %v528
    %533 = vrot.lane.b32.xlu0 %v527, 32
    %v534 = vpop.permute.xlu0 %533
    %535 = vrot.lane.b32.xlu0 %v528, 32
    %v536 = vpop.permute.xlu0 %535
    %v539 = vmul.f32 %v501, %v534
    %v540 = vmul.f32 %v502, %v536
    %v541 = vsel %vm167, %v529, %v539
    %v542 = vsel %vm167, %v530, %v540
    %s543 = scalar_lea.vmem [#allocation2], 128
    %v544 = vld [vmem:[%s543] sm:$0xff]
    %v545 = vld [vmem:[%s543 + $0x8] sm:$0xff]
    %v546 = vld [vmem:[%s543 + $0x10] sm:$0xff]
    %v547 = vld [vmem:[%s543 + $0x18] sm:$0xff]
    %v548 = vld [vmem:[%s543 + $0x20] sm:$0xff]
    %v549 = vld [vmem:[%s543 + $0x28] sm:$0xff]
    %v550 = vld [vmem:[%s543 + $0x30] sm:$0xff]
    %v551 = vld [vmem:[%s543 + $0x38] sm:$0xff]
    %v553 = vsel %vm85, %v541, 0
    %v556 = vsel %vm85, %v542, 0
    %558 = vmatprep.subr.mxu0 0.0
    %559 = vmatpush1.msra.mxu0 %v544
    %560 = vmatprep.subr.mxu0 0.0
    %561 = vmatpush1.msra.mxu0 %v545
    %562 = vmatprep.subr.mxu0 0.0
    %563 = vmatpush1.msra.mxu0 %v546
    %564 = vmatprep.subr.mxu0 0.0
    %565 = vmatpush1.msra.mxu0 %v547
    %566 = vmatprep.subr.mxu0 0.0
    %567 = vmatpush1.msra.mxu0 %v548
    %568 = vmatprep.subr.mxu0 0.0
    %569 = vmatpush1.msra.mxu0 %v549
    %570 = vmatprep.subr.mxu0 0.0
    %571 = vmatpush1.msra.mxu0 %v550
    %572 = vmatprep.subr.mxu0 0.0
    %573 = vmatpush1.msra.mxu0 %v551
    %574 = vmatprep.subr.mxu0 0.0
    %575 = vmatpush1.msra.mxu0 0.0
    %576 = vmatprep.subr.mxu0 0.0
    %577 = vmatpush1.msra.mxu0 0.0
    %578 = vmatprep.subr.mxu0 0.0
    %579 = vmatpush1.msra.mxu0 0.0
    %580 = vmatprep.subr.mxu0 0.0
    %581 = vmatpush1.msra.mxu0 0.0
    %582 = vmatprep.subr.mxu0 0.0
    %583 = vmatpush1.msra.mxu0 0.0
    %584 = vmatprep.subr.mxu0 0.0
    %585 = vmatpush1.msra.mxu0 0.0
    %586 = vmatprep.subr.mxu0 0.0
    %587 = vmatpush1.msra.mxu0 0.0
    %588 = vmatprep.subr.mxu0 0.0
    %589 = vmatpush1.msra.mxu0 0.0
    %590 = vmatprep.subr.mxu0 0.0
    %591 = vmatpush1.msra.mxu0 0.0
    %592 = vmatprep.subr.mxu0 0.0
    %593 = vmatpush1.msra.mxu0 0.0
    %594 = vmatprep.subr.mxu0 0.0
    %595 = vmatpush1.msra.mxu0 0.0
    %596 = vmatprep.subr.mxu0 0.0
    %597 = vmatpush1.msra.mxu0 0.0
    %598 = vmatprep.subr.mxu0 0.0
    %599 = vmatpush1.msra.mxu0 0.0
    %600 = vmatprep.subr.mxu0 0.0
    %601 = vmatpush1.msra.mxu0 0.0
    %602 = vmatprep.subr.mxu0 0.0
    %603 = vmatpush1.msra.mxu0 0.0
    %604 = vmatprep.subr.mxu0 0.0
    %605 = vmatpush1.msra.mxu0 0.0
    %606 = vmatprep.subr.mxu0 0.0
    %607 = vmatpush1.msra.mxu0 0.0
    %608 = vmatprep.subr.mxu0 0.0
    %609 = vmatpush1.msra.mxu0 0.0
    %610 = vmatprep.subr.mxu0 0.0
    %611 = vmatpush1.msra.mxu0 0.0
    %612 = vmatprep.subr.mxu0 0.0
    %613 = vmatpush1.msra.mxu0 0.0
    %614 = vmatprep.subr.mxu0 0.0
    %615 = vmatpush1.msra.mxu0 0.0
    %616 = vmatprep.subr.mxu0 0.0
    %617 = vmatpush1.msra.mxu0 0.0
    %618 = vmatprep.subr.mxu0 0.0
    %619 = vmatpush1.msra.mxu0 0.0
    %620 = vmatprep.subr.mxu0 0.0
    %621 = vmatpush1.msra.mxu0 0.0
    %622 = vmatprep.mubr.f32.mxu0 0.0
    %623 = vmatmul.mubr.f32.gmra.mrb[0].mxu0 %v553
    %v624 = vpop.f32.mrb[0].mxu0
    %v625 = vadd.f32 0.0, %v624
    %v626 = vpop.f32.mrb[0].mxu0
    %627 = vmatprep.mubr.f32.mxu0 0.0
    %628 = vmatmul.mubr.f32.gmra.mrb[0].mxu0 %v556
    %v629 = vpop.f32.mrb[0].mxu0
    %v630 = vadd.f32 0.0, %v629
    %v631 = vpop.f32.mrb[0].mxu0
    %632 = vdwg.mxu0
    %v633 = vsel %vm167, %v625, 0.0
    %634 = vadd.xlane.f32.xlu0 %v633
    %v635 = vpop.xlane.xlu0 %634
    %v636 = vsel %vm167, %v630, 0.0
    %637 = vadd.xlane.f32.xlu0 %v636
    %v638 = vpop.xlane.xlu0 %637
    %v639 = vmul.f32 %v635, %v174
    %v640 = vmul.f32 %v638, %v174
    %v641 = vsub.f32 %v625, %v639
    %v642 = vsub.f32 %v630, %v640
    %v643 = vmul.f32 %v641, %v641
    %v644 = vmul.f32 %v642, %v642
    %v645 = vsel %vm167, %v643, 0.0
    %646 = vadd.xlane.f32.xlu0 %v645
    %v647 = vpop.xlane.xlu0 %646
    %v648 = vsel %vm167, %v644, 0.0
    %649 = vadd.xlane.f32.xlu0 %v648
    %v650 = vpop.xlane.xlu0 %649
    %v651 = vmul.f32 %v647, %v174
    %v652 = vmul.f32 %v650, %v174
    %v653 = vadd.f32 %v651, 1e-05
    %v654 = vadd.f32 %v652, 1e-05
    %v655 = vrsqrt.pop %v653
    %v656 = vrsqrt.pop %v654
    %v657 = vmul.f32 %v641, %v655
    %v658 = vmul.f32 %v642, %v656
    %v659 = vlaneseq
    %v660 = vshrl.u32 %v659, 7
    %v661 = vsub.s32 0, %v660
    %v662 = vrot.slane %v73, %v661
    %v663 = vmul.f32 %v657, %v662
    %v664 = vmul.f32 %v658, %v662
    %v665 = vlaneseq
    %v666 = vshrl.u32 %v665, 7
    %v667 = vsub.s32 1, %v666
    %v668 = vrot.slane %v73, %v667
    %v669 = vadd.f32 %v663, %v668
    %v670 = vadd.f32 %v664, %v668
    %673 = vrot.lane.b32.xlu0 %v625, 96
    %v674 = vpop.permute.xlu0 %673
    %675 = vrot.lane.b32.xlu0 %v630, 96
    %v676 = vpop.permute.xlu0 %675
    %v679 = vsel %vm167, %v674, 0.0
    %680 = vadd.xlane.f32.xlu0 %v679
    %v681 = vpop.xlane.xlu0 %680
    %v682 = vsel %vm167, %v676, 0.0
    %683 = vadd.xlane.f32.xlu0 %v682
    %v684 = vpop.xlane.xlu0 %683
    %v685 = vmul.f32 %v681, %v174
    %v686 = vmul.f32 %v684, %v174
    %v687 = vsub.f32 %v625, %v685
    %v688 = vsub.f32 %v630, %v686
    %v689 = vmul.f32 %v687, %v687
    %v690 = vmul.f32 %v688, %v688
    %693 = vrot.lane.b32.xlu0 %v689, 96
    %v694 = vpop.permute.xlu0 %693
    %695 = vrot.lane.b32.xlu0 %v690, 96
    %v696 = vpop.permute.xlu0 %695
    %v699 = vsel %vm167, %v694, 0.0
    %700 = vadd.xlane.f32.xlu0 %v699
    %v701 = vpop.xlane.xlu0 %700
    %v702 = vsel %vm167, %v696, 0.0
    %703 = vadd.xlane.f32.xlu0 %v702
    %v704 = vpop.xlane.xlu0 %703
    %v705 = vmul.f32 %v701, %v174
    %v706 = vmul.f32 %v704, %v174
    %v707 = vadd.f32 %v705, 1e-05
    %v708 = vadd.f32 %v706, 1e-05
    %v709 = vrsqrt.pop %v707
    %v710 = vrsqrt.pop %v708
    %v711 = vmul.f32 %v687, %v709
    %v712 = vmul.f32 %v688, %v710
    %v713 = vlaneseq
    %v714 = vshrl.u32 %v713, 7
    %v715 = vsub.s32 2, %v714
    %v716 = vrot.slane %v73, %v715
    %718 = vrot.lane.b32.xlu0 %v716, 32
    %v719 = vpop.permute.xlu0 %718
    %v721 = vmul.f32 %v711, %v719
    %v722 = vmul.f32 %v712, %v719
    %v723 = vlaneseq
    %v724 = vshrl.u32 %v723, 7
    %v725 = vsub.s32 3, %v724
    %v726 = vrot.slane %v73, %v725
    %728 = vrot.lane.b32.xlu0 %v726, 32
    %v729 = vpop.permute.xlu0 %728
    %v731 = vadd.f32 %v721, %v729
    %v732 = vadd.f32 %v722, %v729
    %s733 = sld [smem:[#allocation8 + $0x2]]
    %v734 = vmul.f32 %v669, %v669
    %v735 = vmul.f32 %v670, %v670
    %v736 = vmul.f32 %v731, %v731
    %v737 = vmul.f32 %v732, %v732
    %740 = vrot.lane.b32.xlu0 %v736, 96
    %v741 = vpop.permute.xlu0 %740
    %742 = vrot.lane.b32.xlu0 %v737, 96
    %v743 = vpop.permute.xlu0 %742
    %v746 = vadd.f32 %v734, %v741
    %v747 = vadd.f32 %v735, %v743
    %v748 = vadd.f32 %v746, 1e-12
    %v749 = vadd.f32 %v747, 1e-12
    %v750 = vrsqrt.pop %v748
    %v751 = vrsqrt.pop %v749
    %v752 = vstv %s733
    %v753 = vmul.f32 %v752, %v750
    %v754 = vmul.f32 %v752, %v751
    %v755 = vsub.f32 1.0, %v753
    %v756 = vsub.f32 1.0, %v754
    %v757 = vmax.f32 %v755, 0.0
    %v758 = vmax.f32 %v756, 0.0
    %v759 = vmul.f32 %v669, %v757
    %v760 = vmul.f32 %v670, %v758
    %763 = vrot.lane.b32.xlu0 %v757, 32
    %v764 = vpop.permute.xlu0 %763
    %765 = vrot.lane.b32.xlu0 %v758, 32
    %v766 = vpop.permute.xlu0 %765
    %v769 = vmul.f32 %v731, %v764
    %v770 = vmul.f32 %v732, %v766
    %v771 = vsel %vm167, %v759, %v769
    %v772 = vsel %vm167, %v760, %v770
    %s773 = scalar_lea.vmem [#allocation2], 192
    %v774 = vld [vmem:[%s773] sm:$0xff]
    %v775 = vld [vmem:[%s773 + $0x8] sm:$0xff]
    %v776 = vld [vmem:[%s773 + $0x10] sm:$0xff]
    %v777 = vld [vmem:[%s773 + $0x18] sm:$0xff]
    %v778 = vld [vmem:[%s773 + $0x20] sm:$0xff]
    %v779 = vld [vmem:[%s773 + $0x28] sm:$0xff]
    %v780 = vld [vmem:[%s773 + $0x30] sm:$0xff]
    %v781 = vld [vmem:[%s773 + $0x38] sm:$0xff]
    %v783 = vsel %vm85, %v771, 0
    %v786 = vsel %vm85, %v772, 0
    %788 = vmatprep.subr.mxu0 0.0
    %789 = vmatpush1.msra.mxu0 %v774
    %790 = vmatprep.subr.mxu0 0.0
    %791 = vmatpush1.msra.mxu0 %v775
    %792 = vmatprep.subr.mxu0 0.0
    %793 = vmatpush1.msra.mxu0 %v776
    %794 = vmatprep.subr.mxu0 0.0
    %795 = vmatpush1.msra.mxu0 %v777
    %796 = vmatprep.subr.mxu0 0.0
    %797 = vmatpush1.msra.mxu0 %v778
    %798 = vmatprep.subr.mxu0 0.0
    %799 = vmatpush1.msra.mxu0 %v779
    %800 = vmatprep.subr.mxu0 0.0
    %801 = vmatpush1.msra.mxu0 %v780
    %802 = vmatprep.subr.mxu0 0.0
    %803 = vmatpush1.msra.mxu0 %v781
    %804 = vmatprep.subr.mxu0 0.0
    %805 = vmatpush1.msra.mxu0 0.0
    %806 = vmatprep.subr.mxu0 0.0
    %807 = vmatpush1.msra.mxu0 0.0
    %808 = vmatprep.subr.mxu0 0.0
    %809 = vmatpush1.msra.mxu0 0.0
    %810 = vmatprep.subr.mxu0 0.0
    %811 = vmatpush1.msra.mxu0 0.0
    %812 = vmatprep.subr.mxu0 0.0
    %813 = vmatpush1.msra.mxu0 0.0
    %814 = vmatprep.subr.mxu0 0.0
    %815 = vmatpush1.msra.mxu0 0.0
    %816 = vmatprep.subr.mxu0 0.0
    %817 = vmatpush1.msra.mxu0 0.0
    %818 = vmatprep.subr.mxu0 0.0
    %819 = vmatpush1.msra.mxu0 0.0
    %820 = vmatprep.subr.mxu0 0.0
    %821 = vmatpush1.msra.mxu0 0.0
    %822 = vmatprep.subr.mxu0 0.0
    %823 = vmatpush1.msra.mxu0 0.0
    %824 = vmatprep.subr.mxu0 0.0
    %825 = vmatpush1.msra.mxu0 0.0
    %826 = vmatprep.subr.mxu0 0.0
    %827 = vmatpush1.msra.mxu0 0.0
    %828 = vmatprep.subr.mxu0 0.0
    %829 = vmatpush1.msra.mxu0 0.0
    %830 = vmatprep.subr.mxu0 0.0
    %831 = vmatpush1.msra.mxu0 0.0
    %832 = vmatprep.subr.mxu0 0.0
    %833 = vmatpush1.msra.mxu0 0.0
    %834 = vmatprep.subr.mxu0 0.0
    %835 = vmatpush1.msra.mxu0 0.0
    %836 = vmatprep.subr.mxu0 0.0
    %837 = vmatpush1.msra.mxu0 0.0
    %838 = vmatprep.subr.mxu0 0.0
    %839 = vmatpush1.msra.mxu0 0.0
    %840 = vmatprep.subr.mxu0 0.0
    %841 = vmatpush1.msra.mxu0 0.0
    %842 = vmatprep.subr.mxu0 0.0
    %843 = vmatpush1.msra.mxu0 0.0
    %844 = vmatprep.subr.mxu0 0.0
    %845 = vmatpush1.msra.mxu0 0.0
    %846 = vmatprep.subr.mxu0 0.0
    %847 = vmatpush1.msra.mxu0 0.0
    %848 = vmatprep.subr.mxu0 0.0
    %849 = vmatpush1.msra.mxu0 0.0
    %850 = vmatprep.subr.mxu0 0.0
    %851 = vmatpush1.msra.mxu0 0.0
    %852 = vmatprep.mubr.f32.mxu0 0.0
    %853 = vmatmul.mubr.f32.gmra.mrb[0].mxu0 %v783
    %v854 = vpop.f32.mrb[0].mxu0
    %v855 = vadd.f32 0.0, %v854
    %v856 = vpop.f32.mrb[0].mxu0
    %857 = vmatprep.mubr.f32.mxu0 0.0
    %858 = vmatmul.mubr.f32.gmra.mrb[0].mxu0 %v786
    %v859 = vpop.f32.mrb[0].mxu0
    %v860 = vadd.f32 0.0, %v859
    %v861 = vpop.f32.mrb[0].mxu0
    %862 = vdwg.mxu0
    %v863 = vsel %vm167, %v855, 0.0
    %864 = vadd.xlane.f32.xlu0 %v863
    %v865 = vpop.xlane.xlu0 %864
    %v866 = vsel %vm167, %v860, 0.0
    %867 = vadd.xlane.f32.xlu0 %v866
    %v868 = vpop.xlane.xlu0 %867
    %v869 = vmul.f32 %v865, %v174
    %v870 = vmul.f32 %v868, %v174
    %v871 = vsub.f32 %v855, %v869
    %v872 = vsub.f32 %v860, %v870
    %v873 = vmul.f32 %v871, %v871
    %v874 = vmul.f32 %v872, %v872
    %v875 = vsel %vm167, %v873, 0.0
    %876 = vadd.xlane.f32.xlu0 %v875
    %v877 = vpop.xlane.xlu0 %876
    %v878 = vsel %vm167, %v874, 0.0
    %879 = vadd.xlane.f32.xlu0 %v878
    %v880 = vpop.xlane.xlu0 %879
    %v881 = vmul.f32 %v877, %v174
    %v882 = vmul.f32 %v880, %v174
    %v883 = vadd.f32 %v881, 1e-05
    %v884 = vadd.f32 %v882, 1e-05
    %v885 = vrsqrt.pop %v883
    %v886 = vrsqrt.pop %v884
    %v887 = vmul.f32 %v871, %v885
    %v888 = vmul.f32 %v872, %v886
    %v889 = vlaneseq
    %v890 = vshrl.u32 %v889, 7
    %v891 = vsub.s32 4, %v890
    %v892 = vrot.slane %v73, %v891
    %v893 = vmul.f32 %v887, %v892
    %v894 = vmul.f32 %v888, %v892
    %v895 = vlaneseq
    %v896 = vshrl.u32 %v895, 7
    %v897 = vsub.s32 5, %v896
    %v898 = vrot.slane %v73, %v897
    %v899 = vadd.f32 %v893, %v898
    %v900 = vadd.f32 %v894, %v898
    %903 = vrot.lane.b32.xlu0 %v855, 96
    %v904 = vpop.permute.xlu0 %903
    %905 = vrot.lane.b32.xlu0 %v860, 96
    %v906 = vpop.permute.xlu0 %905
    %v909 = vsel %vm167, %v904, 0.0
    %910 = vadd.xlane.f32.xlu0 %v909
    %v911 = vpop.xlane.xlu0 %910
    %v912 = vsel %vm167, %v906, 0.0
    %913 = vadd.xlane.f32.xlu0 %v912
    %v914 = vpop.xlane.xlu0 %913
    %v915 = vmul.f32 %v911, %v174
    %v916 = vmul.f32 %v914, %v174
    %v917 = vsub.f32 %v855, %v915
    %v918 = vsub.f32 %v860, %v916
    %v919 = vmul.f32 %v917, %v917
    %v920 = vmul.f32 %v918, %v918
    %923 = vrot.lane.b32.xlu0 %v919, 96
    %v924 = vpop.permute.xlu0 %923
    %925 = vrot.lane.b32.xlu0 %v920, 96
    %v926 = vpop.permute.xlu0 %925
    %v929 = vsel %vm167, %v924, 0.0
    %930 = vadd.xlane.f32.xlu0 %v929
    %v931 = vpop.xlane.xlu0 %930
    %v932 = vsel %vm167, %v926, 0.0
    %933 = vadd.xlane.f32.xlu0 %v932
    %v934 = vpop.xlane.xlu0 %933
    %v935 = vmul.f32 %v931, %v174
    %v936 = vmul.f32 %v934, %v174
    %v937 = vadd.f32 %v935, 1e-05
    %v938 = vadd.f32 %v936, 1e-05
    %v939 = vrsqrt.pop %v937
    %v940 = vrsqrt.pop %v938
    %v941 = vmul.f32 %v917, %v939
    %v942 = vmul.f32 %v918, %v940
    %v943 = vlaneseq
    %v944 = vshrl.u32 %v943, 7
    %v945 = vsub.s32 6, %v944
    %v946 = vrot.slane %v73, %v945
    %948 = vrot.lane.b32.xlu0 %v946, 32
    %v949 = vpop.permute.xlu0 %948
    %v951 = vmul.f32 %v941, %v949
    %v952 = vmul.f32 %v942, %v949
    %v953 = vlaneseq
    %v954 = vshrl.u32 %v953, 7
    %v955 = vsub.s32 7, %v954
    %v956 = vrot.slane %v73, %v955
    %958 = vrot.lane.b32.xlu0 %v956, 32
    %v959 = vpop.permute.xlu0 %958
    %v961 = vadd.f32 %v951, %v959
    %v962 = vadd.f32 %v952, %v959
    %v963 = vadd.f32 %v899, %v529
    %v964 = vadd.f32 %v900, %v530
    %v965 = vadd.f32 %v961, %v539
    %v966 = vadd.f32 %v962, %v540
    %s967 = sld [smem:[#allocation8 + $0x3]]
    %v968 = vmul.f32 %v963, %v963
    %v969 = vmul.f32 %v964, %v964
    %v970 = vmul.f32 %v965, %v965
    %v971 = vmul.f32 %v966, %v966
    %974 = vrot.lane.b32.xlu0 %v970, 96
    %v975 = vpop.permute.xlu0 %974
    %976 = vrot.lane.b32.xlu0 %v971, 96
    %v977 = vpop.permute.xlu0 %976
    %v980 = vadd.f32 %v968, %v975
    %v981 = vadd.f32 %v969, %v977
    %v982 = vadd.f32 %v980, 1e-12
    %v983 = vadd.f32 %v981, 1e-12
    %v984 = vrsqrt.pop %v982
    %v985 = vrsqrt.pop %v983
    %v986 = vstv %s967
    %v987 = vmul.f32 %v986, %v984
    %v988 = vmul.f32 %v986, %v985
    %v989 = vsub.f32 1.0, %v987
    %v990 = vsub.f32 1.0, %v988
    %v991 = vmax.f32 %v989, 0.0
    %v992 = vmax.f32 %v990, 0.0
    %v993 = vmul.f32 %v963, %v991
    %v994 = vmul.f32 %v964, %v992
    %997 = vrot.lane.b32.xlu0 %v991, 32
    %v998 = vpop.permute.xlu0 %997
    %999 = vrot.lane.b32.xlu0 %v992, 32
    %v1000 = vpop.permute.xlu0 %999
    %v1003 = vmul.f32 %v965, %v998
    %v1004 = vmul.f32 %v966, %v1000
    %v1005 = vsel %vm167, %v993, %v1003
    %v1006 = vsel %vm167, %v994, %v1004
    %s1007 = scalar_lea.vmem [#allocation2], 256
    %v1008 = vld [vmem:[%s1007] sm:$0xff]
    %v1009 = vld [vmem:[%s1007 + $0x8] sm:$0xff]
    %v1010 = vld [vmem:[%s1007 + $0x10] sm:$0xff]
    %v1011 = vld [vmem:[%s1007 + $0x18] sm:$0xff]
    %v1012 = vld [vmem:[%s1007 + $0x20] sm:$0xff]
    %v1013 = vld [vmem:[%s1007 + $0x28] sm:$0xff]
    %v1014 = vld [vmem:[%s1007 + $0x30] sm:$0xff]
    %v1015 = vld [vmem:[%s1007 + $0x38] sm:$0xff]
    %v1017 = vsel %vm85, %v1005, 0
    %v1020 = vsel %vm85, %v1006, 0
    %1022 = vmatprep.subr.mxu0 0.0
    %1023 = vmatpush1.msra.mxu0 %v1008
    %1024 = vmatprep.subr.mxu0 0.0
    %1025 = vmatpush1.msra.mxu0 %v1009
    %1026 = vmatprep.subr.mxu0 0.0
    %1027 = vmatpush1.msra.mxu0 %v1010
    %1028 = vmatprep.subr.mxu0 0.0
    %1029 = vmatpush1.msra.mxu0 %v1011
    %1030 = vmatprep.subr.mxu0 0.0
    %1031 = vmatpush1.msra.mxu0 %v1012
    %1032 = vmatprep.subr.mxu0 0.0
    %1033 = vmatpush1.msra.mxu0 %v1013
    %1034 = vmatprep.subr.mxu0 0.0
    %1035 = vmatpush1.msra.mxu0 %v1014
    %1036 = vmatprep.subr.mxu0 0.0
    %1037 = vmatpush1.msra.mxu0 %v1015
    %1038 = vmatprep.subr.mxu0 0.0
    %1039 = vmatpush1.msra.mxu0 0.0
    %1040 = vmatprep.subr.mxu0 0.0
    %1041 = vmatpush1.msra.mxu0 0.0
    %1042 = vmatprep.subr.mxu0 0.0
    %1043 = vmatpush1.msra.mxu0 0.0
    %1044 = vmatprep.subr.mxu0 0.0
    %1045 = vmatpush1.msra.mxu0 0.0
    %1046 = vmatprep.subr.mxu0 0.0
    %1047 = vmatpush1.msra.mxu0 0.0
    %1048 = vmatprep.subr.mxu0 0.0
    %1049 = vmatpush1.msra.mxu0 0.0
    %1050 = vmatprep.subr.mxu0 0.0
    %1051 = vmatpush1.msra.mxu0 0.0
    %1052 = vmatprep.subr.mxu0 0.0
    %1053 = vmatpush1.msra.mxu0 0.0
    %1054 = vmatprep.subr.mxu0 0.0
    %1055 = vmatpush1.msra.mxu0 0.0
    %1056 = vmatprep.subr.mxu0 0.0
    %1057 = vmatpush1.msra.mxu0 0.0
    %1058 = vmatprep.subr.mxu0 0.0
    %1059 = vmatpush1.msra.mxu0 0.0
    %1060 = vmatprep.subr.mxu0 0.0
    %1061 = vmatpush1.msra.mxu0 0.0
    %1062 = vmatprep.subr.mxu0 0.0
    %1063 = vmatpush1.msra.mxu0 0.0
    %1064 = vmatprep.subr.mxu0 0.0
    %1065 = vmatpush1.msra.mxu0 0.0
    %1066 = vmatprep.subr.mxu0 0.0
    %1067 = vmatpush1.msra.mxu0 0.0
    %1068 = vmatprep.subr.mxu0 0.0
    %1069 = vmatpush1.msra.mxu0 0.0
    %1070 = vmatprep.subr.mxu0 0.0
    %1071 = vmatpush1.msra.mxu0 0.0
    %1072 = vmatprep.subr.mxu0 0.0
    %1073 = vmatpush1.msra.mxu0 0.0
    %1074 = vmatprep.subr.mxu0 0.0
    %1075 = vmatpush1.msra.mxu0 0.0
    %1076 = vmatprep.subr.mxu0 0.0
    %1077 = vmatpush1.msra.mxu0 0.0
    %1078 = vmatprep.subr.mxu0 0.0
    %1079 = vmatpush1.msra.mxu0 0.0
    %1080 = vmatprep.subr.mxu0 0.0
    %1081 = vmatpush1.msra.mxu0 0.0
    %1082 = vmatprep.subr.mxu0 0.0
    %1083 = vmatpush1.msra.mxu0 0.0
    %1084 = vmatprep.subr.mxu0 0.0
    %1085 = vmatpush1.msra.mxu0 0.0
    %1086 = vmatprep.mubr.f32.mxu0 0.0
    %1087 = vmatmul.mubr.f32.gmra.mrb[0].mxu0 %v1017
    %v1088 = vpop.f32.mrb[0].mxu0
    %v1089 = vadd.f32 0.0, %v1088
    %v1090 = vpop.f32.mrb[0].mxu0
    %1091 = vmatprep.mubr.f32.mxu0 0.0
    %1092 = vmatmul.mubr.f32.gmra.mrb[0].mxu0 %v1020
    %v1093 = vpop.f32.mrb[0].mxu0
    %v1094 = vadd.f32 0.0, %v1093
    %v1095 = vpop.f32.mrb[0].mxu0
    %1096 = vdwg.mxu0
    %v1097 = vsel %vm167, %v1089, 0.0
    %1098 = vadd.xlane.f32.xlu0 %v1097
    %v1099 = vpop.xlane.xlu0 %1098
    %v1100 = vsel %vm167, %v1094, 0.0
    %1101 = vadd.xlane.f32.xlu0 %v1100
    %v1102 = vpop.xlane.xlu0 %1101
    %v1103 = vmul.f32 %v1099, %v174
    %v1104 = vmul.f32 %v1102, %v174
    %v1105 = vsub.f32 %v1089, %v1103
    %v1106 = vsub.f32 %v1094, %v1104
    %v1107 = vmul.f32 %v1105, %v1105
    %v1108 = vmul.f32 %v1106, %v1106
    %v1109 = vsel %vm167, %v1107, 0.0
    %1110 = vadd.xlane.f32.xlu0 %v1109
    %v1111 = vpop.xlane.xlu0 %1110
    %v1112 = vsel %vm167, %v1108, 0.0
    %1113 = vadd.xlane.f32.xlu0 %v1112
    %v1114 = vpop.xlane.xlu0 %1113
    %v1115 = vmul.f32 %v1111, %v174
    %v1116 = vmul.f32 %v1114, %v174
    %v1117 = vadd.f32 %v1115, 1e-05
    %v1118 = vadd.f32 %v1116, 1e-05
    %v1119 = vrsqrt.pop %v1117
    %v1120 = vrsqrt.pop %v1118
    %v1121 = vmul.f32 %v1105, %v1119
    %v1122 = vmul.f32 %v1106, %v1120
    %v1123 = vlaneseq
    %v1124 = vshrl.u32 %v1123, 7
    %v1125 = vsub.s32 0, %v1124
    %v1126 = vrot.slane %v74, %v1125
    %v1127 = vmul.f32 %v1121, %v1126
    %v1128 = vmul.f32 %v1122, %v1126
    %v1129 = vlaneseq
    %v1130 = vshrl.u32 %v1129, 7
    %v1131 = vsub.s32 1, %v1130
    %v1132 = vrot.slane %v74, %v1131
    %v1133 = vadd.f32 %v1127, %v1132
    %v1134 = vadd.f32 %v1128, %v1132
    %1137 = vrot.lane.b32.xlu0 %v1089, 96
    %v1138 = vpop.permute.xlu0 %1137
    %1139 = vrot.lane.b32.xlu0 %v1094, 96
    %v1140 = vpop.permute.xlu0 %1139
    %v1143 = vsel %vm167, %v1138, 0.0
    %1144 = vadd.xlane.f32.xlu0 %v1143
    %v1145 = vpop.xlane.xlu0 %1144
    %v1146 = vsel %vm167, %v1140, 0.0
    %1147 = vadd.xlane.f32.xlu0 %v1146
    %v1148 = vpop.xlane.xlu0 %1147
    %v1149 = vmul.f32 %v1145, %v174
    %v1150 = vmul.f32 %v1148, %v174
    %v1151 = vsub.f32 %v1089, %v1149
    %v1152 = vsub.f32 %v1094, %v1150
    %v1153 = vmul.f32 %v1151, %v1151
    %v1154 = vmul.f32 %v1152, %v1152
    %1157 = vrot.lane.b32.xlu0 %v1153, 96
    %v1158 = vpop.permute.xlu0 %1157
    %1159 = vrot.lane.b32.xlu0 %v1154, 96
    %v1160 = vpop.permute.xlu0 %1159
    %v1163 = vsel %vm167, %v1158, 0.0
    %1164 = vadd.xlane.f32.xlu0 %v1163
    %v1165 = vpop.xlane.xlu0 %1164
    %v1166 = vsel %vm167, %v1160, 0.0
    %1167 = vadd.xlane.f32.xlu0 %v1166
    %v1168 = vpop.xlane.xlu0 %1167
    %v1169 = vmul.f32 %v1165, %v174
    %v1170 = vmul.f32 %v1168, %v174
    %v1171 = vadd.f32 %v1169, 1e-05
    %v1172 = vadd.f32 %v1170, 1e-05
    %v1173 = vrsqrt.pop %v1171
    %v1174 = vrsqrt.pop %v1172
    %v1175 = vmul.f32 %v1151, %v1173
    %v1176 = vmul.f32 %v1152, %v1174
    %v1177 = vlaneseq
    %v1178 = vshrl.u32 %v1177, 7
    %v1179 = vsub.s32 2, %v1178
    %v1180 = vrot.slane %v74, %v1179
    %1182 = vrot.lane.b32.xlu0 %v1180, 32
    %v1183 = vpop.permute.xlu0 %1182
    %v1185 = vmul.f32 %v1175, %v1183
    %v1186 = vmul.f32 %v1176, %v1183
    %v1187 = vlaneseq
    %v1188 = vshrl.u32 %v1187, 7
    %v1189 = vsub.s32 3, %v1188
    %v1190 = vrot.slane %v74, %v1189
    %1192 = vrot.lane.b32.xlu0 %v1190, 32
    %v1193 = vpop.permute.xlu0 %1192
    %v1195 = vadd.f32 %v1185, %v1193
    %v1196 = vadd.f32 %v1186, %v1193
    %s1197 = sld [smem:[#allocation8 + $0x4]]
    %v1198 = vmul.f32 %v1133, %v1133
    %v1199 = vmul.f32 %v1134, %v1134
    %v1200 = vmul.f32 %v1195, %v1195
    %v1201 = vmul.f32 %v1196, %v1196
    %1204 = vrot.lane.b32.xlu0 %v1200, 96
    %v1205 = vpop.permute.xlu0 %1204
    %1206 = vrot.lane.b32.xlu0 %v1201, 96
    %v1207 = vpop.permute.xlu0 %1206
    %v1210 = vadd.f32 %v1198, %v1205
    %v1211 = vadd.f32 %v1199, %v1207
    %v1212 = vadd.f32 %v1210, 1e-12
    %v1213 = vadd.f32 %v1211, 1e-12
    %v1214 = vrsqrt.pop %v1212
    %v1215 = vrsqrt.pop %v1213
    %v1216 = vstv %s1197
    %v1217 = vmul.f32 %v1216, %v1214
    %v1218 = vmul.f32 %v1216, %v1215
    %v1219 = vsub.f32 1.0, %v1217
    %v1220 = vsub.f32 1.0, %v1218
    %v1221 = vmax.f32 %v1219, 0.0
    %v1222 = vmax.f32 %v1220, 0.0
    %v1223 = vmul.f32 %v1133, %v1221
    %v1224 = vmul.f32 %v1134, %v1222
    %1227 = vrot.lane.b32.xlu0 %v1221, 32
    %v1228 = vpop.permute.xlu0 %1227
    %1229 = vrot.lane.b32.xlu0 %v1222, 32
    %v1230 = vpop.permute.xlu0 %1229
    %v1233 = vmul.f32 %v1195, %v1228
    %v1234 = vmul.f32 %v1196, %v1230
    %v1235 = vsel %vm167, %v1223, %v1233
    %v1236 = vsel %vm167, %v1224, %v1234
    %s1237 = scalar_lea.vmem [#allocation2], 320
    %v1238 = vld [vmem:[%s1237] sm:$0xff]
    %v1239 = vld [vmem:[%s1237 + $0x8] sm:$0xff]
    %v1240 = vld [vmem:[%s1237 + $0x10] sm:$0xff]
    %v1241 = vld [vmem:[%s1237 + $0x18] sm:$0xff]
    %v1242 = vld [vmem:[%s1237 + $0x20] sm:$0xff]
    %v1243 = vld [vmem:[%s1237 + $0x28] sm:$0xff]
    %v1244 = vld [vmem:[%s1237 + $0x30] sm:$0xff]
    %v1245 = vld [vmem:[%s1237 + $0x38] sm:$0xff]
    %v1247 = vsel %vm85, %v1235, 0
    %v1250 = vsel %vm85, %v1236, 0
    %1252 = vmatprep.subr.mxu0 0.0
    %1253 = vmatpush1.msra.mxu0 %v1238
    %1254 = vmatprep.subr.mxu0 0.0
    %1255 = vmatpush1.msra.mxu0 %v1239
    %1256 = vmatprep.subr.mxu0 0.0
    %1257 = vmatpush1.msra.mxu0 %v1240
    %1258 = vmatprep.subr.mxu0 0.0
    %1259 = vmatpush1.msra.mxu0 %v1241
    %1260 = vmatprep.subr.mxu0 0.0
    %1261 = vmatpush1.msra.mxu0 %v1242
    %1262 = vmatprep.subr.mxu0 0.0
    %1263 = vmatpush1.msra.mxu0 %v1243
    %1264 = vmatprep.subr.mxu0 0.0
    %1265 = vmatpush1.msra.mxu0 %v1244
    %1266 = vmatprep.subr.mxu0 0.0
    %1267 = vmatpush1.msra.mxu0 %v1245
    %1268 = vmatprep.subr.mxu0 0.0
    %1269 = vmatpush1.msra.mxu0 0.0
    %1270 = vmatprep.subr.mxu0 0.0
    %1271 = vmatpush1.msra.mxu0 0.0
    %1272 = vmatprep.subr.mxu0 0.0
    %1273 = vmatpush1.msra.mxu0 0.0
    %1274 = vmatprep.subr.mxu0 0.0
    %1275 = vmatpush1.msra.mxu0 0.0
    %1276 = vmatprep.subr.mxu0 0.0
    %1277 = vmatpush1.msra.mxu0 0.0
    %1278 = vmatprep.subr.mxu0 0.0
    %1279 = vmatpush1.msra.mxu0 0.0
    %1280 = vmatprep.subr.mxu0 0.0
    %1281 = vmatpush1.msra.mxu0 0.0
    %1282 = vmatprep.subr.mxu0 0.0
    %1283 = vmatpush1.msra.mxu0 0.0
    %1284 = vmatprep.subr.mxu0 0.0
    %1285 = vmatpush1.msra.mxu0 0.0
    %1286 = vmatprep.subr.mxu0 0.0
    %1287 = vmatpush1.msra.mxu0 0.0
    %1288 = vmatprep.subr.mxu0 0.0
    %1289 = vmatpush1.msra.mxu0 0.0
    %1290 = vmatprep.subr.mxu0 0.0
    %1291 = vmatpush1.msra.mxu0 0.0
    %1292 = vmatprep.subr.mxu0 0.0
    %1293 = vmatpush1.msra.mxu0 0.0
    %1294 = vmatprep.subr.mxu0 0.0
    %1295 = vmatpush1.msra.mxu0 0.0
    %1296 = vmatprep.subr.mxu0 0.0
    %1297 = vmatpush1.msra.mxu0 0.0
    %1298 = vmatprep.subr.mxu0 0.0
    %1299 = vmatpush1.msra.mxu0 0.0
    %1300 = vmatprep.subr.mxu0 0.0
    %1301 = vmatpush1.msra.mxu0 0.0
    %1302 = vmatprep.subr.mxu0 0.0
    %1303 = vmatpush1.msra.mxu0 0.0
    %1304 = vmatprep.subr.mxu0 0.0
    %1305 = vmatpush1.msra.mxu0 0.0
    %1306 = vmatprep.subr.mxu0 0.0
    %1307 = vmatpush1.msra.mxu0 0.0
    %1308 = vmatprep.subr.mxu0 0.0
    %1309 = vmatpush1.msra.mxu0 0.0
    %1310 = vmatprep.subr.mxu0 0.0
    %1311 = vmatpush1.msra.mxu0 0.0
    %1312 = vmatprep.subr.mxu0 0.0
    %1313 = vmatpush1.msra.mxu0 0.0
    %1314 = vmatprep.subr.mxu0 0.0
    %1315 = vmatpush1.msra.mxu0 0.0
    %1316 = vmatprep.mubr.f32.mxu0 0.0
    %1317 = vmatmul.mubr.f32.gmra.mrb[0].mxu0 %v1247
    %v1318 = vpop.f32.mrb[0].mxu0
    %v1319 = vadd.f32 0.0, %v1318
    %v1320 = vpop.f32.mrb[0].mxu0
    %1321 = vmatprep.mubr.f32.mxu0 0.0
    %1322 = vmatmul.mubr.f32.gmra.mrb[0].mxu0 %v1250
    %v1323 = vpop.f32.mrb[0].mxu0
    %v1324 = vadd.f32 0.0, %v1323
    %v1325 = vpop.f32.mrb[0].mxu0
    %1326 = vdwg.mxu0
    %v1327 = vsel %vm167, %v1319, 0.0
    %1328 = vadd.xlane.f32.xlu0 %v1327
    %v1329 = vpop.xlane.xlu0 %1328
    %v1330 = vsel %vm167, %v1324, 0.0
    %1331 = vadd.xlane.f32.xlu0 %v1330
    %v1332 = vpop.xlane.xlu0 %1331
    %v1333 = vmul.f32 %v1329, %v174
    %v1334 = vmul.f32 %v1332, %v174
    %v1335 = vsub.f32 %v1319, %v1333
    %v1336 = vsub.f32 %v1324, %v1334
    %v1337 = vmul.f32 %v1335, %v1335
    %v1338 = vmul.f32 %v1336, %v1336
    %v1339 = vsel %vm167, %v1337, 0.0
    %1340 = vadd.xlane.f32.xlu0 %v1339
    %v1341 = vpop.xlane.xlu0 %1340
    %v1342 = vsel %vm167, %v1338, 0.0
    %1343 = vadd.xlane.f32.xlu0 %v1342
    %v1344 = vpop.xlane.xlu0 %1343
    %v1345 = vmul.f32 %v1341, %v174
    %v1346 = vmul.f32 %v1344, %v174
    %v1347 = vadd.f32 %v1345, 1e-05
    %v1348 = vadd.f32 %v1346, 1e-05
    %v1349 = vrsqrt.pop %v1347
    %v1350 = vrsqrt.pop %v1348
    %v1351 = vmul.f32 %v1335, %v1349
    %v1352 = vmul.f32 %v1336, %v1350
    %v1353 = vlaneseq
    %v1354 = vshrl.u32 %v1353, 7
    %v1355 = vsub.s32 4, %v1354
    %v1356 = vrot.slane %v74, %v1355
    %v1357 = vmul.f32 %v1351, %v1356
    %v1358 = vmul.f32 %v1352, %v1356
    %v1359 = vlaneseq
    %v1360 = vshrl.u32 %v1359, 7
    %v1361 = vsub.s32 5, %v1360
    %v1362 = vrot.slane %v74, %v1361
    %v1363 = vadd.f32 %v1357, %v1362
    %v1364 = vadd.f32 %v1358, %v1362
    %1367 = vrot.lane.b32.xlu0 %v1319, 96
    %v1368 = vpop.permute.xlu0 %1367
    %1369 = vrot.lane.b32.xlu0 %v1324, 96
    %v1370 = vpop.permute.xlu0 %1369
    %v1373 = vsel %vm167, %v1368, 0.0
    %1374 = vadd.xlane.f32.xlu0 %v1373
    %v1375 = vpop.xlane.xlu0 %1374
    %v1376 = vsel %vm167, %v1370, 0.0
    %1377 = vadd.xlane.f32.xlu0 %v1376
    %v1378 = vpop.xlane.xlu0 %1377
    %v1379 = vmul.f32 %v1375, %v174
    %v1380 = vmul.f32 %v1378, %v174
    %v1381 = vsub.f32 %v1319, %v1379
    %v1382 = vsub.f32 %v1324, %v1380
    %v1383 = vmul.f32 %v1381, %v1381
    %v1384 = vmul.f32 %v1382, %v1382
    %1387 = vrot.lane.b32.xlu0 %v1383, 96
    %v1388 = vpop.permute.xlu0 %1387
    %1389 = vrot.lane.b32.xlu0 %v1384, 96
    %v1390 = vpop.permute.xlu0 %1389
    %v1393 = vsel %vm167, %v1388, 0.0
    %1394 = vadd.xlane.f32.xlu0 %v1393
    %v1395 = vpop.xlane.xlu0 %1394
    %v1396 = vsel %vm167, %v1390, 0.0
    %1397 = vadd.xlane.f32.xlu0 %v1396
    %v1398 = vpop.xlane.xlu0 %1397
    %v1399 = vmul.f32 %v1395, %v174
    %v1400 = vmul.f32 %v1398, %v174
    %v1401 = vadd.f32 %v1399, 1e-05
    %v1402 = vadd.f32 %v1400, 1e-05
    %v1403 = vrsqrt.pop %v1401
    %v1404 = vrsqrt.pop %v1402
    %v1405 = vmul.f32 %v1381, %v1403
    %v1406 = vmul.f32 %v1382, %v1404
    %v1407 = vlaneseq
    %v1408 = vshrl.u32 %v1407, 7
    %v1409 = vsub.s32 6, %v1408
    %v1410 = vrot.slane %v74, %v1409
    %1412 = vrot.lane.b32.xlu0 %v1410, 32
    %v1413 = vpop.permute.xlu0 %1412
    %v1415 = vmul.f32 %v1405, %v1413
    %v1416 = vmul.f32 %v1406, %v1413
    %v1417 = vlaneseq
    %v1418 = vshrl.u32 %v1417, 7
    %v1419 = vsub.s32 7, %v1418
    %v1420 = vrot.slane %v74, %v1419
    %1422 = vrot.lane.b32.xlu0 %v1420, 32
    %v1423 = vpop.permute.xlu0 %1422
    %v1425 = vadd.f32 %v1415, %v1423
    %v1426 = vadd.f32 %v1416, %v1423
    %v1427 = vadd.f32 %v1363, %v993
    %v1428 = vadd.f32 %v1364, %v994
    %v1429 = vadd.f32 %v1425, %v1003
    %v1430 = vadd.f32 %v1426, %v1004
    %s1431 = sld [smem:[#allocation8 + $0x5]]
    %v1432 = vmul.f32 %v1427, %v1427
    %v1433 = vmul.f32 %v1428, %v1428
    %v1434 = vmul.f32 %v1429, %v1429
    %v1435 = vmul.f32 %v1430, %v1430
    %1438 = vrot.lane.b32.xlu0 %v1434, 96
    %v1439 = vpop.permute.xlu0 %1438
    %1440 = vrot.lane.b32.xlu0 %v1435, 96
    %v1441 = vpop.permute.xlu0 %1440
    %v1444 = vadd.f32 %v1432, %v1439
    %v1445 = vadd.f32 %v1433, %v1441
    %v1446 = vadd.f32 %v1444, 1e-12
    %v1447 = vadd.f32 %v1445, 1e-12
    %v1448 = vrsqrt.pop %v1446
    %v1449 = vrsqrt.pop %v1447
    %v1450 = vstv %s1431
    %v1451 = vmul.f32 %v1450, %v1448
    %v1452 = vmul.f32 %v1450, %v1449
    %v1453 = vsub.f32 1.0, %v1451
    %v1454 = vsub.f32 1.0, %v1452
    %v1455 = vmax.f32 %v1453, 0.0
    %v1456 = vmax.f32 %v1454, 0.0
    %v1457 = vmul.f32 %v1427, %v1455
    %v1458 = vmul.f32 %v1428, %v1456
    %1461 = vrot.lane.b32.xlu0 %v1455, 32
    %v1462 = vpop.permute.xlu0 %1461
    %1463 = vrot.lane.b32.xlu0 %v1456, 32
    %v1464 = vpop.permute.xlu0 %1463
    %v1467 = vmul.f32 %v1429, %v1462
    %v1468 = vmul.f32 %v1430, %v1464
    %v1469 = vsel %vm167, %v1457, %v1467
    %v1470 = vsel %vm167, %v1458, %v1468
    %s1471 = scalar_lea.vmem [#allocation2], 384
    %v1472 = vld [vmem:[%s1471] sm:$0xff]
    %v1473 = vld [vmem:[%s1471 + $0x8] sm:$0xff]
    %v1474 = vld [vmem:[%s1471 + $0x10] sm:$0xff]
    %v1475 = vld [vmem:[%s1471 + $0x18] sm:$0xff]
    %v1476 = vld [vmem:[%s1471 + $0x20] sm:$0xff]
    %v1477 = vld [vmem:[%s1471 + $0x28] sm:$0xff]
    %v1478 = vld [vmem:[%s1471 + $0x30] sm:$0xff]
    %v1479 = vld [vmem:[%s1471 + $0x38] sm:$0xff]
    %v1481 = vsel %vm85, %v1469, 0
    %v1484 = vsel %vm85, %v1470, 0
    %1486 = vmatprep.subr.mxu0 0.0
    %1487 = vmatpush1.msra.mxu0 %v1472
    %1488 = vmatprep.subr.mxu0 0.0
    %1489 = vmatpush1.msra.mxu0 %v1473
    %1490 = vmatprep.subr.mxu0 0.0
    %1491 = vmatpush1.msra.mxu0 %v1474
    %1492 = vmatprep.subr.mxu0 0.0
    %1493 = vmatpush1.msra.mxu0 %v1475
    %1494 = vmatprep.subr.mxu0 0.0
    %1495 = vmatpush1.msra.mxu0 %v1476
    %1496 = vmatprep.subr.mxu0 0.0
    %1497 = vmatpush1.msra.mxu0 %v1477
    %1498 = vmatprep.subr.mxu0 0.0
    %1499 = vmatpush1.msra.mxu0 %v1478
    %1500 = vmatprep.subr.mxu0 0.0
    %1501 = vmatpush1.msra.mxu0 %v1479
    %1502 = vmatprep.subr.mxu0 0.0
    %1503 = vmatpush1.msra.mxu0 0.0
    %1504 = vmatprep.subr.mxu0 0.0
    %1505 = vmatpush1.msra.mxu0 0.0
    %1506 = vmatprep.subr.mxu0 0.0
    %1507 = vmatpush1.msra.mxu0 0.0
    %1508 = vmatprep.subr.mxu0 0.0
    %1509 = vmatpush1.msra.mxu0 0.0
    %1510 = vmatprep.subr.mxu0 0.0
    %1511 = vmatpush1.msra.mxu0 0.0
    %1512 = vmatprep.subr.mxu0 0.0
    %1513 = vmatpush1.msra.mxu0 0.0
    %1514 = vmatprep.subr.mxu0 0.0
    %1515 = vmatpush1.msra.mxu0 0.0
    %1516 = vmatprep.subr.mxu0 0.0
    %1517 = vmatpush1.msra.mxu0 0.0
    %1518 = vmatprep.subr.mxu0 0.0
    %1519 = vmatpush1.msra.mxu0 0.0
    %1520 = vmatprep.subr.mxu0 0.0
    %1521 = vmatpush1.msra.mxu0 0.0
    %1522 = vmatprep.subr.mxu0 0.0
    %1523 = vmatpush1.msra.mxu0 0.0
    %1524 = vmatprep.subr.mxu0 0.0
    %1525 = vmatpush1.msra.mxu0 0.0
    %1526 = vmatprep.subr.mxu0 0.0
    %1527 = vmatpush1.msra.mxu0 0.0
    %1528 = vmatprep.subr.mxu0 0.0
    %1529 = vmatpush1.msra.mxu0 0.0
    %1530 = vmatprep.subr.mxu0 0.0
    %1531 = vmatpush1.msra.mxu0 0.0
    %1532 = vmatprep.subr.mxu0 0.0
    %1533 = vmatpush1.msra.mxu0 0.0
    %1534 = vmatprep.subr.mxu0 0.0
    %1535 = vmatpush1.msra.mxu0 0.0
    %1536 = vmatprep.subr.mxu0 0.0
    %1537 = vmatpush1.msra.mxu0 0.0
    %1538 = vmatprep.subr.mxu0 0.0
    %1539 = vmatpush1.msra.mxu0 0.0
    %1540 = vmatprep.subr.mxu0 0.0
    %1541 = vmatpush1.msra.mxu0 0.0
    %1542 = vmatprep.subr.mxu0 0.0
    %1543 = vmatpush1.msra.mxu0 0.0
    %1544 = vmatprep.subr.mxu0 0.0
    %1545 = vmatpush1.msra.mxu0 0.0
    %1546 = vmatprep.subr.mxu0 0.0
    %1547 = vmatpush1.msra.mxu0 0.0
    %1548 = vmatprep.subr.mxu0 0.0
    %1549 = vmatpush1.msra.mxu0 0.0
    %1550 = vmatprep.mubr.f32.mxu0 0.0
    %1551 = vmatmul.mubr.f32.gmra.mrb[0].mxu0 %v1481
    %v1552 = vpop.f32.mrb[0].mxu0
    %v1553 = vadd.f32 0.0, %v1552
    %v1554 = vpop.f32.mrb[0].mxu0
    %1555 = vmatprep.mubr.f32.mxu0 0.0
    %1556 = vmatmul.mubr.f32.gmra.mrb[0].mxu0 %v1484
    %v1557 = vpop.f32.mrb[0].mxu0
    %v1558 = vadd.f32 0.0, %v1557
    %v1559 = vpop.f32.mrb[0].mxu0
    %1560 = vdwg.mxu0
    %1561 = vst.msk [vmem:[#allocation10] sm:$0xff] %vm85, %v1553
    %1562 = vst.msk [vmem:[#allocation10 + $0x8] sm:$0xff] %vm85, %v1558
    // Predicated region
    $region34: #{tpu_custom_call.1} parent=1 // pred_check
      _
    $region35: #{tpu_custom_call.1} parent=1 // pred_check_branch
      %1564 = sbr.rel (0) target = $region37
    $region36: #{tpu_custom_call.1} parent=1 // pred_region
      %s1566 = ssub.s32 256, 256
      %1567 = vsyncadd [#allocation4], %s1566
      %s1568 = sshll.u32 [#allocation10], 4
      %s1569 = int_to_ptr.vmem [resolvable:$true] %s1568
      %1574 = dma.vmem_to_hbm [thread:$0]  %s1569, 256, %s4, [#allocation4], 128, 128, 8
    $region37: #{tpu_custom_call.1} parent=1 // pred_fallthru
      _
    // Predicated region
    $region38: #{tpu_custom_call.1} parent=1 // pred_check
      _
    $region39: #{tpu_custom_call.1} parent=1 // pred_check_branch
      %1576 = sbr.rel (0) target = $region41
    $region40: #{tpu_custom_call.1} parent=1 // pred_region
      %1577 = dma.done [#allocation4], 256
    $region41: #{tpu_custom_call.1} parent=1 // pred_fallthru
      _
    %1578 = vsyncpa [#allocation3], 1
    %1579 = vsyncpa [#allocation7], 1
    %1580 = vsyncpa [#allocation4], 1
    %1581 = vsyncpa [#allocation5], 1

</llo_original>
